<compile_context>
chip_gen: v7x
topology: tpu7x:2x2x1
jax: 0.10.0
libtpu: 0.0.40
codegen_flags: <defaults>
</compile_context>

<pallas_src>
import jax
import jax.numpy as jnp
from jax.experimental import pallas as pl
from jax.experimental.pallas import tpu as pltpu


def _round_up(x, m):
    return (x + m - 1) // m * m


def _vmem_capacity_bytes():
    """Per-core VMEM capacity; conservative (v7x) fallback if the query fails."""
    try:
        return int(pltpu.get_tpu_info().vmem_capacity_bytes)
    except Exception:
        return 64 * 1024 * 1024


def _vmem_footprint_bytes(tile_b, tile_k):
    """Estimated VMEM footprint, assuming the pipeline double-buffers every input."""
    x_buf = 2 * tile_b * tile_k * 4          # f32 x tile (cast to bf16 in-kernel)
    w1_buf = 2 * tile_k * 512 * 2            # w1 block, bf16
    w2_buf = 2 * 512 * 256 * 2               # resident w2, bf16
    acc = tile_b * 512 * 4                   # layer-1 f32 accumulator scratch
    out_buf = 2 * tile_b * 128 * 4           # (TILE_B, 1) block pads to 128 lanes
    misc = 2 * 1024 * 1024                   # biases, h1/h2 temporaries, slack
    return x_buf + w1_buf + w2_buf + acc + out_buf + misc


def _choose_tile_b(B, tile_k, budget):
    """Largest power-of-two-ish batch tile that fits the VMEM budget; megacore-aware."""
    tile_b = 1024
    while tile_b > 128 and _vmem_footprint_bytes(tile_b, tile_k) > budget:
        tile_b //= 2
    if B <= tile_b:
        if B >= 256:
            # Shrink so the batch grid has >= 2 steps and both v7x TCs get work.
            tile_b = max(128, _round_up(pl.cdiv(B, 2), 128))
        else:
            tile_b = _round_up(B, 8)
    return tile_b


def _disc_kernel(x_ref, w1_ref, b1_ref, w2_ref, b2_ref, w3t_ref, b3_ref,
                 o_ref, acc_ref):
    k = pl.program_id(1)

    @pl.when(k == 0)
    def _():
        acc_ref[...] = jnp.zeros_like(acc_ref)

    # Layer 1 (partial K product). The f32 -> bf16 cast happens here, per tile,
    # on the VPU (hidden under the MXU) instead of as a separate HBM round trip.
    acc_ref[...] += jnp.dot(x_ref[...].astype(jnp.bfloat16), w1_ref[...],
                            preferred_element_type=jnp.float32)

    @pl.when(k == pl.num_programs(1) - 1)
    def _():
        h1 = acc_ref[...] + b1_ref[...]
        h1 = jnp.maximum(h1, 0.2 * h1)                      # LeakyReLU(0.2)
        # Layer 2: (TILE_B, 512) @ (512, 256), bf16 operands, f32 accumulate.
        h2 = jnp.dot(h1.astype(jnp.bfloat16), w2_ref[...],
                     preferred_element_type=jnp.float32)
        h2 = h2 + b2_ref[...]
        h2 = jnp.maximum(h2, 0.2 * h2)                      # LeakyReLU(0.2)
        # Layer 3 (256 -> 1): VPU mul + lane reduction instead of an N=1 MXU pass.
        out = jnp.sum(h2 * w3t_ref[...], axis=-1, keepdims=True) + b3_ref[...]
        o_ref[...] = out.astype(o_ref.dtype)


def discriminator_forward(img, params):
    """img: (B, C, H, W) float32. Returns validity of shape (B, 1) float32."""
    w1, b1, w2, b2, w3, b3 = params
    B = img.shape[0]
    D = 1
    for s in img.shape[1:]:
        D *= s
    # Same semantics as torch .view(B, -1); stays f32 in HBM (cast is in-kernel).
    x = img.reshape(B, D).astype(jnp.float32)

    # Small/medium D: keep the whole w1 resident (single full-D K block, no pads).
    # Large D: tile K on an innermost grid axis so VMEM stays O(TILE_B x TILE_K).
    K_RESIDENT_CAP = 4096
    if D <= K_RESIDENT_CAP:
        tile_k, Dp = D, D
    else:
        tile_k = 512
        Dp = _round_up(D, tile_k)
        if Dp != D:
            # Zero feature rows/lanes cannot affect the result.
            x = jnp.pad(x, ((0, 0), (0, Dp - D)))
            w1 = jnp.pad(w1, ((0, Dp - D), (0, 0)))
    nk = Dp // tile_k

    cap = _vmem_capacity_bytes()                            # 64 MiB v7x, 128 MiB v5e/v6e
    budget = max(24 * 1024 * 1024, cap // 2 - 8 * 1024 * 1024)
    tile_b = _choose_tile_b(B, tile_k, budget)
    nb = pl.cdiv(B, tile_b)                                 # no batch pad; masked last block

    footprint = _vmem_footprint_bytes(tile_b, tile_k)
    vmem_limit = int(min(cap * 3 // 4, max(32 * 1024 * 1024, footprint + 8 * 1024 * 1024)))

    # bf16 MXU weights; biases / final-layer vector stay f32 (VPU math in f32).
    w1_bf = w1.astype(jnp.bfloat16)
    w2_bf = w2.astype(jnp.bfloat16)
    w3_t = w3.reshape(1, -1).astype(jnp.float32)            # (1, 256)
    b1r = b1.reshape(1, -1).astype(jnp.float32)
    b2r = b2.reshape(1, -1).astype(jnp.float32)
    b3r = b3.reshape(1, 1).astype(jnp.float32)

    resident = lambda shape: pl.BlockSpec(shape, lambda i, k: (0,) * len(shape))

    out = pl.pallas_call(
        _disc_kernel,
        out_shape=jax.ShapeDtypeStruct((B, 1), jnp.float32),
        grid=(nb, nk),
        in_specs=[
            pl.BlockSpec((tile_b, tile_k), lambda i, k: (i, k)),   # x: batch x K tiled
            pl.BlockSpec((tile_k, 512), lambda i, k: (k, 0)),      # w1: K tiled (resident if nk==1)
            resident(b1r.shape),
            resident(w2_bf.shape), resident(b2r.shape),
            resident(w3_t.shape), resident(b3r.shape),
        ],
        out_specs=pl.BlockSpec((tile_b, 1), lambda i, k: (i, 0)),
        scratch_shapes=[pltpu.VMEM((tile_b, 512), jnp.float32)],   # layer-1 accumulator
        compiler_params=pltpu.CompilerParams(
            dimension_semantics=("parallel", "arbitrary"),
            vmem_limit_bytes=vmem_limit),
    )(x, w1_bf, b1r, w2_bf, b2r, w3_t, b3r)
    return out


def init_params(key, in_dim):
    """Deterministic init mimicking torch.nn.Linear default (uniform +/- 1/sqrt(fan_in))."""
    dims = [(in_dim, 512), (512, 256), (256, 1)]
    params = []
    for (fan_in, fan_out) in dims:
        key, kw, kb = jax.random.split(key, 3)
        bound = 1.0 / (fan_in ** 0.5)
        w = jax.random.uniform(kw, (fan_in, fan_out), jnp.float32, -bound, bound)
        b = jax.random.uniform(kb, (1, fan_out), jnp.float32, -bound, bound)
        params += [w, b]
    return tuple(params)


def _reference(img, params):
    """Pure-f32 reference matching the PyTorch module semantics."""
    w1, b1, w2, b2, w3, b3 = params
    x = img.reshape(img.shape[0], -1)
    h = x @ w1 + b1
    h = jnp.where(h > 0, h, 0.2 * h)
    h = h @ w2 + b2
    h = jnp.where(h > 0, h, 0.2 * h)
    return h @ w3 + b3


if __name__ == "__main__":
    key = jax.random.PRNGKey(0)
    img_shape = (4, 16, 16)          # (C, H, W) -> D = 1024
    B = 2
    key, kimg = jax.random.split(key)
    img = jax.random.normal(kimg, (B,) + img_shape, jnp.float32)

    D = 1
    for s in img_shape:
        D *= s
    params = init_params(key, D)

    fwd = jax.jit(discriminator_forward)
    out = jax.block_until_ready(fwd(img, params))

    ref = _reference(img, params)
    assert out.shape == (B, 1), out.shape
    # bf16 MXU operands with f32 accumulation -> loose tolerance vs f32 reference.
    assert jnp.allclose(out, ref, atol=5e-2, rtol=5e-2), (out, ref)
    print("KERNEL_OK")
</pallas_src>

<mosaic_0001>
module attributes {stable_mosaic.version = 11 : i64} {
  func.func @_disc_kernel(%arg0: i32, %arg1: i32, %arg2: memref<8x1024xf32, #tpu.memory_space<vmem>>, %arg3: memref<1024x512xbf16, #tpu.memory_space<vmem>>, %arg4: memref<1x512xf32, #tpu.memory_space<vmem>>, %arg5: memref<512x256xbf16, #tpu.memory_space<vmem>>, %arg6: memref<1x256xf32, #tpu.memory_space<vmem>>, %arg7: memref<1x256xf32, #tpu.memory_space<vmem>>, %arg8: memref<1x1xf32, #tpu.memory_space<vmem>>, %arg9: memref<8x1xf32, #tpu.memory_space<vmem>>, %arg10: memref<8x512xf32, #tpu.memory_space<vmem>>) attributes {dimension_semantics = [#tpu.dimension_semantics<parallel>, #tpu.dimension_semantics<arbitrary>], iteration_bounds = array<i64: 1, 1>, scalar_prefetch = 0 : i64, scratch_operands = 1 : i64, tpu.core_type = #tpu.core_type<tc>, window_params = [{transform_indices = @transform_0, window_bounds = array<i64: 8, 1024>}, {transform_indices = @transform_1, window_bounds = array<i64: 1024, 512>}, {pipeline_mode = #tpu.pipeline_mode<synchronous>, transform_indices = @transform_2, window_bounds = array<i64: 1, 512>}, {pipeline_mode = #tpu.pipeline_mode<synchronous>, transform_indices = @transform_3, window_bounds = array<i64: 512, 256>}, {pipeline_mode = #tpu.pipeline_mode<synchronous>, transform_indices = @transform_4, window_bounds = array<i64: 1, 256>}, {pipeline_mode = #tpu.pipeline_mode<synchronous>, transform_indices = @transform_5, window_bounds = array<i64: 1, 256>}, {pipeline_mode = #tpu.pipeline_mode<synchronous>, transform_indices = @transform_6, window_bounds = array<i64: 1, 1>}, {transform_indices = @transform_7, window_bounds = array<i64: 8, 1>}]} {
    %c0_i32 = arith.constant 0 : i32
    %0 = arith.cmpi eq, %arg1, %c0_i32 : i32
    %1 = arith.extui %0 : i1 to i32
    %c0_i32_0 = arith.constant 0 : i32
    %2 = arith.cmpi ne, %1, %c0_i32_0 : i32
    scf.if %2 {
      %cst_10 = arith.constant 0.000000e+00 : f32
      %13 = vector.broadcast %cst_10 : f32 to vector<8x512xf32>
      %c0_11 = arith.constant 0 : index
      %c0_12 = arith.constant 0 : index
      %14 = vector.load %arg10[%c0_11, %c0_12] : memref<8x512xf32, #tpu.memory_space<vmem>>, vector<8x512xf32>
      tpu.vector_store %arg10[%c0_11, %c0_12], %13 {strides = array<i32>} : memref<8x512xf32, #tpu.memory_space<vmem>>, vector<8x512xf32>,
    } else {
    }
    %c0 = arith.constant 0 : index
    %c0_1 = arith.constant 0 : index
    %3 = vector.load %arg10[%c0, %c0_1] : memref<8x512xf32, #tpu.memory_space<vmem>>, vector<8x512xf32>
    %c0_2 = arith.constant 0 : index
    %c0_3 = arith.constant 0 : index
    %4 = vector.load %arg2[%c0_2, %c0_3] : memref<8x1024xf32, #tpu.memory_space<vmem>>, vector<8x1024xf32>
    %5 = arith.truncf %4 : vector<8x1024xf32> to vector<8x1024xbf16>
    %c0_4 = arith.constant 0 : index
    %c0_5 = arith.constant 0 : index
    %6 = vector.load %arg3[%c0_4, %c0_5] : memref<1024x512xbf16, #tpu.memory_space<vmem>>, vector<1024x512xbf16>
    %cst = arith.constant dense<0.000000e+00> : vector<8x512xf32>
    %7 = tpu.matmul %5, %6, %cst {dimension_numbers = #tpu.dot_dimension_numbers<[1], [0], [0], [1], [0, 0, 1, 1], [], []>} : vector<8x1024xbf16>, vector<1024x512xbf16>, vector<8x512xf32> -> vector<8x512xf32>
    %8 = arith.addf %3, %7 : vector<8x512xf32>
    %c0_6 = arith.constant 0 : index
    %c0_7 = arith.constant 0 : index
    %9 = vector.load %arg10[%c0_6, %c0_7] : memref<8x512xf32, #tpu.memory_space<vmem>>, vector<8x512xf32>
    tpu.vector_store %arg10[%c0_6, %c0_7], %8 {strides = array<i32>} : memref<8x512xf32, #tpu.memory_space<vmem>>, vector<8x512xf32>,
    %c0_i32_8 = arith.constant 0 : i32
    %10 = arith.cmpi eq, %arg1, %c0_i32_8 : i32
    %11 = arith.extui %10 : i1 to i32
    %c0_i32_9 = arith.constant 0 : i32
    %12 = arith.cmpi ne, %11, %c0_i32_9 : i32
    scf.if %12 {
      %c0_10 = arith.constant 0 : index
      %c0_11 = arith.constant 0 : index
      %13 = vector.load %arg10[%c0_10, %c0_11] : memref<8x512xf32, #tpu.memory_space<vmem>>, vector<8x512xf32>
      %c0_12 = arith.constant 0 : index
      %c0_13 = arith.constant 0 : index
      %14 = vector.load %arg4[%c0_12, %c0_13] : memref<1x512xf32, #tpu.memory_space<vmem>>, vector<1x512xf32>
      %15 = vector.broadcast %14 : vector<1x512xf32> to vector<8x512xf32>
      %16 = arith.addf %13, %15 : vector<8x512xf32>
      %cst_14 = arith.constant 2.000000e-01 : f32
      %17 = vector.broadcast %cst_14 : f32 to vector<8x512xf32>
      %18 = arith.mulf %17, %16 : vector<8x512xf32>
      %19 = arith.maximumf %16, %18 : vector<8x512xf32>
      %20 = arith.truncf %19 : vector<8x512xf32> to vector<8x512xbf16>
      %c0_15 = arith.constant 0 : index
      %c0_16 = arith.constant 0 : index
      %21 = vector.load %arg5[%c0_15, %c0_16] : memref<512x256xbf16, #tpu.memory_space<vmem>>, vector<512x256xbf16>
      %cst_17 = arith.constant dense<0.000000e+00> : vector<8x256xf32>
      %22 = tpu.matmul %20, %21, %cst_17 {dimension_numbers = #tpu.dot_dimension_numbers<[1], [0], [0], [1], [0, 0, 1, 1], [], []>} : vector<8x512xbf16>, vector<512x256xbf16>, vector<8x256xf32> -> vector<8x256xf32>
      %c0_18 = arith.constant 0 : index
      %c0_19 = arith.constant 0 : index
      %23 = vector.load %arg6[%c0_18, %c0_19] : memref<1x256xf32, #tpu.memory_space<vmem>>, vector<1x256xf32>
      %24 = vector.broadcast %23 : vector<1x256xf32> to vector<8x256xf32>
      %25 = arith.addf %22, %24 : vector<8x256xf32>
      %cst_20 = arith.constant 2.000000e-01 : f32
      %26 = vector.broadcast %cst_20 : f32 to vector<8x256xf32>
      %27 = arith.mulf %26, %25 : vector<8x256xf32>
      %28 = arith.maximumf %25, %27 : vector<8x256xf32>
      %c0_21 = arith.constant 0 : index
      %c0_22 = arith.constant 0 : index
      %29 = vector.load %arg7[%c0_21, %c0_22] : memref<1x256xf32, #tpu.memory_space<vmem>>, vector<1x256xf32>
      %30 = vector.broadcast %29 : vector<1x256xf32> to vector<8x256xf32>
      %31 = arith.mulf %28, %30 : vector<8x256xf32>
      %cst_23 = arith.constant dense<0.000000e+00> : vector<8xf32>
      %32 = vector.multi_reduction <add>, %31, %cst_23 [1] : vector<8x256xf32> to vector<8xf32>
      %33 = vector.shape_cast %32 : vector<8xf32> to vector<8x1xf32>
      %c0_24 = arith.constant 0 : index
      %c0_25 = arith.constant 0 : index
      %34 = vector.load %arg8[%c0_24, %c0_25] : memref<1x1xf32, #tpu.memory_space<vmem>>, vector<1x1xf32>
      %35 = vector.broadcast %34 : vector<1x1xf32> to vector<8x1xf32>
      %36 = arith.addf %33, %35 : vector<8x1xf32>
      %c0_26 = arith.constant 0 : index
      %c0_27 = arith.constant 0 : index
      %37 = vector.load %arg9[%c0_26, %c0_27] : memref<8x1xf32, #tpu.memory_space<vmem>>, vector<8x1xf32>
      tpu.vector_store %arg9[%c0_26, %c0_27], %36 {strides = array<i32>} : memref<8x1xf32, #tpu.memory_space<vmem>>, vector<8x1xf32>,
    } else {
    }
    return
  }
  func.func @transform_0(%arg0: i32, %arg1: i32) -> (i32, i32) {
    %c0_i32 = arith.constant 0 : i32
    return %arg0, %arg1 : i32, i32
  }
  func.func @transform_1(%arg0: i32, %arg1: i32) -> (i32, i32) {
    %c0_i32 = arith.constant 0 : i32
    %c0_i32_0 = arith.constant 0 : i32
    return %arg1, %c0_i32 : i32, i32
  }
  func.func @transform_2(%arg0: i32, %arg1: i32) -> (i32, i32) {
    %c0_i32 = arith.constant 0 : i32
    %c0_i32_0 = arith.constant 0 : i32
    %c0_i32_1 = arith.constant 0 : i32
    return %c0_i32, %c0_i32_0 : i32, i32
  }
  func.func @transform_3(%arg0: i32, %arg1: i32) -> (i32, i32) {
    %c0_i32 = arith.constant 0 : i32
    %c0_i32_0 = arith.constant 0 : i32
    %c0_i32_1 = arith.constant 0 : i32
    return %c0_i32, %c0_i32_0 : i32, i32
  }
  func.func @transform_4(%arg0: i32, %arg1: i32) -> (i32, i32) {
    %c0_i32 = arith.constant 0 : i32
    %c0_i32_0 = arith.constant 0 : i32
    %c0_i32_1 = arith.constant 0 : i32
    return %c0_i32, %c0_i32_0 : i32, i32
  }
  func.func @transform_5(%arg0: i32, %arg1: i32) -> (i32, i32) {
    %c0_i32 = arith.constant 0 : i32
    %c0_i32_0 = arith.constant 0 : i32
    %c0_i32_1 = arith.constant 0 : i32
    return %c0_i32, %c0_i32_0 : i32, i32
  }
  func.func @transform_6(%arg0: i32, %arg1: i32) -> (i32, i32) {
    %c0_i32 = arith.constant 0 : i32
    %c0_i32_0 = arith.constant 0 : i32
    %c0_i32_1 = arith.constant 0 : i32
    return %c0_i32, %c0_i32_0 : i32, i32
  }
  func.func @transform_7(%arg0: i32, %arg1: i32) -> (i32, i32) {
    %c0_i32 = arith.constant 0 : i32
    %c0_i32_0 = arith.constant 0 : i32
    return %arg0, %c0_i32 : i32, i32
  }
}

</mosaic_0001>

<llo_original>
// kernel: discriminator_forward.1
$region0: #{discriminator_forward.1}
  #allocation0 [shape = 'u32[]', space=smem, size = 0x4, offset = 0x4, fixed_abs, tag = 'smem constant byte address 0x4 - core index']
  #allocation1 [shape = 'u32[144,128]{1,0:T(1,128)}', space=vmem, size = 0x12000, scoped, tag = 'internal scratch']
  #allocation2 [shape = 'f32[8,512]{1,0:T(8,128)}', space=vmem, size = 0x4000, scoped, tag = 'scratch operand']
  #allocation3 [shape = 'f32[1,1]{1,0:T(1,128)S(1)}', space=vmem, size = 0x200, scoped, tag = 'scoped memory for discriminator_forward.1']
  %s0 = inlined_call_operand.vmem [shape: f32[2,1024], index: 0, kind: input, shape index: {}]
  %s1 = inlined_call_operand.vmem [shape: bf16[1024,512], index: 1, kind: input, shape index: {}]
  %s2 = inlined_call_operand.vmem [shape: f32[1,512], index: 2, kind: input, shape index: {}]
  %s3 = inlined_call_operand.vmem [shape: bf16[512,256], index: 3, kind: input, shape index: {}]
  %s4 = inlined_call_operand.vmem [shape: f32[1,256], index: 4, kind: input, shape index: {}]
  %s5 = inlined_call_operand.vmem [shape: f32[1,256], index: 5, kind: input, shape index: {}]
  %s6 = inlined_call_operand.<no memory space> [shape: f32[1,1], index: 6, kind: input, shape index: {}]
  %s7 = inlined_call_operand.vmem [shape: f32[2,1], index: 7, kind: output, shape index: {}]
  %s8 = sld [smem:[#allocation0]]
  $region76: #{discriminator_forward.1} parent=0
    _
  %s10 = ssub.s32 1, %s8
  %s11 = scalar_select 0, %s10, %s8
  %v12 = vstv %s6
  %13 = vst [vmem:[#allocation3] sm:$0x1] %v12
  $region1: #{discriminator_forward.1} parent=0
    #allocation4 [shape = 'u8[4096]{0}', space=vmem, size = 0x1000, scoped, tag = 'output window, operand 0, single buffered']
    // Predicated region
    $region2: #{discriminator_forward.1} parent=1 // pred_check
      _
    $region3: #{discriminator_forward.1} parent=1 // pred_check_branch
      %15 = sbr.rel (0) target = $region5
    $region4: #{discriminator_forward.1} parent=1 // pred_region
      _
    $region5: #{discriminator_forward.1} parent=1 // pred_fallthru
      _
    // Predicated region
    $region6: #{discriminator_forward.1} parent=1 // pred_check
      _
    $region7: #{discriminator_forward.1} parent=1 // pred_check_branch
      %17 = sbr.rel (0) target = $region9
    $region8: #{discriminator_forward.1} parent=1 // pred_region
      _
    $region9: #{discriminator_forward.1} parent=1 // pred_fallthru
      _
    // Predicated region
    $region10: #{discriminator_forward.1} parent=1 // pred_check
      _
    $region11: #{discriminator_forward.1} parent=1 // pred_check_branch
      %19 = sbr.rel (0) target = $region13
    $region12: #{discriminator_forward.1} parent=1 // pred_region
      _
    $region13: #{discriminator_forward.1} parent=1 // pred_fallthru
      _
    // Predicated region
    $region14: #{discriminator_forward.1} parent=1 // pred_check
      _
    $region15: #{discriminator_forward.1} parent=1 // pred_check_branch
      %21 = sbr.rel (0) target = $region17
    $region16: #{discriminator_forward.1} parent=1 // pred_region
      _
    $region17: #{discriminator_forward.1} parent=1 // pred_fallthru
      _
    // Predicated region
    $region18: #{discriminator_forward.1} parent=1 // pred_check
      _
    $region19: #{discriminator_forward.1} parent=1 // pred_check_branch
      %23 = sbr.rel (0) target = $region21
    $region20: #{discriminator_forward.1} parent=1 // pred_region
      _
    $region21: #{discriminator_forward.1} parent=1 // pred_fallthru
      _
    // Predicated region
    $region22: #{discriminator_forward.1} parent=1 // pred_check
      _
    $region23: #{discriminator_forward.1} parent=1 // pred_check_branch
      %25 = sbr.rel (0) target = $region25
    $region24: #{discriminator_forward.1} parent=1 // pred_region
      _
    $region25: #{discriminator_forward.1} parent=1 // pred_fallthru
      _
    // Predicated region
    $region26: #{discriminator_forward.1} parent=1 // pred_check
      _
    $region27: #{discriminator_forward.1} parent=1 // pred_check_branch
      %27 = sbr.rel (0) target = $region29
    $region28: #{discriminator_forward.1} parent=1 // pred_region
      _
    $region29: #{discriminator_forward.1} parent=1 // pred_fallthru
      _
    %p28 = scmp.eq.s32.totalorder 0, 0
    // Predicated region
    $region30: #{discriminator_forward.1} parent=1 // pred_check
      %p29 = pneg %p28
    $region31: #{discriminator_forward.1} parent=1 // pred_check_branch
      %31 = sbr.rel (%p29) target = $region33
    $region32: #{discriminator_forward.1} parent=1 // pred_region
      %32 = vst [vmem:[#allocation2] sm:$0xff] 0.0
      %33 = vst [vmem:[#allocation2 + $0x8] sm:$0xff] 0.0
      %34 = vst [vmem:[#allocation2 + $0x10] sm:$0xff] 0.0
      %35 = vst [vmem:[#allocation2 + $0x18] sm:$0xff] 0.0
    $region33: #{discriminator_forward.1} parent=1 // pred_fallthru
      _
    %v36 = vld [vmem:[#allocation2] sm:$0xff]
    %v37 = vld [vmem:[#allocation2 + $0x8] sm:$0xff]
    %v38 = vld [vmem:[#allocation2 + $0x10] sm:$0xff]
    %v39 = vld [vmem:[#allocation2 + $0x18] sm:$0xff]
    %v40 = vld [vmem:[%s0] sm:$0xff]
    %v41 = vld [vmem:[%s0 + $0x8] sm:$0xff]
    %v42 = vld [vmem:[%s0 + $0x10] sm:$0xff]
    %v43 = vld [vmem:[%s0 + $0x18] sm:$0xff]
    %v44 = vld [vmem:[%s0 + $0x20] sm:$0xff]
    %v45 = vld [vmem:[%s0 + $0x28] sm:$0xff]
    %v46 = vld [vmem:[%s0 + $0x30] sm:$0xff]
    %v47 = vld [vmem:[%s0 + $0x38] sm:$0xff]
    %v56 = vcombine.low %v40, %v42
    %v57 = vcombine.high %v40, %v42
    %v58 = vcombine.low %v44, %v46
    %v59 = vcombine.high %v44, %v46
    %v61 = vunpack.c.l.s4 1983009808
    %v62 = vunpack.c.0.s8 %v61
    %v63 = vlaneseq
    %v64 = vshrl.u32 %v63, 7
    %v65 = vsub.s32 %v62, %v64
    %v66 = vrot.slane %v56, %v65
    %v68 = vunpack.c.l.s4 1983009808
    %v69 = vunpack.c.0.s8 %v68
    %v70 = vlaneseq
    %v71 = vshrl.u32 %v70, 7
    %v72 = vsub.s32 %v69, %v71
    %v73 = vrot.slane %v57, %v72
    %v75 = vunpack.c.l.s4 1983009808
    %v76 = vunpack.c.0.s8 %v75
    %v77 = vlaneseq
    %v78 = vshrl.u32 %v77, 7
    %v79 = vsub.s32 %v76, %v78
    %v80 = vrot.slane %v58, %v79
    %v82 = vunpack.c.l.s4 1983009808
    %v83 = vunpack.c.0.s8 %v82
    %v84 = vlaneseq
    %v85 = vshrl.u32 %v84, 7
    %v86 = vsub.s32 %v83, %v85
    %v87 = vrot.slane %v59, %v86
    %v88 = vcombine.low %v66, %v80
    %v89 = vcombine.high %v66, %v80
    %v90 = vcombine.low %v73, %v87
    %v91 = vcombine.high %v73, %v87
    %v92 = vcombine.low %v41, %v43
    %v93 = vcombine.high %v41, %v43
    %v94 = vcombine.low %v45, %v47
    %v95 = vcombine.high %v45, %v47
    %v97 = vunpack.c.l.s4 1983009808
    %v98 = vunpack.c.0.s8 %v97
    %v99 = vlaneseq
    %v100 = vshrl.u32 %v99, 7
    %v101 = vsub.s32 %v98, %v100
    %v102 = vrot.slane %v92, %v101
    %v104 = vunpack.c.l.s4 1983009808
    %v105 = vunpack.c.0.s8 %v104
    %v106 = vlaneseq
    %v107 = vshrl.u32 %v106, 7
    %v108 = vsub.s32 %v105, %v107
    %v109 = vrot.slane %v93, %v108
    %v111 = vunpack.c.l.s4 1983009808
    %v112 = vunpack.c.0.s8 %v111
    %v113 = vlaneseq
    %v114 = vshrl.u32 %v113, 7
    %v115 = vsub.s32 %v112, %v114
    %v116 = vrot.slane %v94, %v115
    %v118 = vunpack.c.l.s4 1983009808
    %v119 = vunpack.c.0.s8 %v118
    %v120 = vlaneseq
    %v121 = vshrl.u32 %v120, 7
    %v122 = vsub.s32 %v119, %v121
    %v123 = vrot.slane %v95, %v122
    %v124 = vcombine.low %v102, %v116
    %v125 = vcombine.high %v102, %v116
    %v126 = vcombine.low %v109, %v123
    %v127 = vcombine.high %v109, %v123
    %v136 = vpack.c.bf16 %v88, %v88
    %v137 = vpack.c.bf16 %v89, %v89
    %v138 = vpack.c.bf16 %v90, %v90
    %v139 = vpack.c.bf16 %v91, %v91
    %v140 = vpack.c.bf16 %v124, %v124
    %v141 = vpack.c.bf16 %v125, %v125
    %v142 = vpack.c.bf16 %v126, %v126
    %v143 = vpack.c.bf16 %v127, %v127
    %v144 = vld [vmem:[%s1] sm:$0xff]
    %v145 = vld [vmem:[%s1 + $0x8] sm:$0xff]
    %v146 = vld [vmem:[%s1 + $0x10] sm:$0xff]
    %v147 = vld [vmem:[%s1 + $0x18] sm:$0xff]
    %v148 = vld [vmem:[%s1 + $0x20] sm:$0xff]
    %v149 = vld [vmem:[%s1 + $0x28] sm:$0xff]
    %v150 = vld [vmem:[%s1 + $0x30] sm:$0xff]
    %v151 = vld [vmem:[%s1 + $0x38] sm:$0xff]
    %v152 = vld [vmem:[%s1 + $0x40] sm:$0xff]
    %v153 = vld [vmem:[%s1 + $0x48] sm:$0xff]
    %v154 = vld [vmem:[%s1 + $0x50] sm:$0xff]
    %v155 = vld [vmem:[%s1 + $0x58] sm:$0xff]
    %v156 = vld [vmem:[%s1 + $0x60] sm:$0xff]
    %v157 = vld [vmem:[%s1 + $0x68] sm:$0xff]
    %v158 = vld [vmem:[%s1 + $0x70] sm:$0xff]
    %v159 = vld [vmem:[%s1 + $0x78] sm:$0xff]
    %v160 = vld [vmem:[%s1 + $0x80] sm:$0xff]
    %v161 = vld [vmem:[%s1 + $0x88] sm:$0xff]
    %v162 = vld [vmem:[%s1 + $0x90] sm:$0xff]
    %v163 = vld [vmem:[%s1 + $0x98] sm:$0xff]
    %v164 = vld [vmem:[%s1 + $0xa0] sm:$0xff]
    %v165 = vld [vmem:[%s1 + $0xa8] sm:$0xff]
    %v166 = vld [vmem:[%s1 + $0xb0] sm:$0xff]
    %v167 = vld [vmem:[%s1 + $0xb8] sm:$0xff]
    %v168 = vld [vmem:[%s1 + $0xc0] sm:$0xff]
    %v169 = vld [vmem:[%s1 + $0xc8] sm:$0xff]
    %v170 = vld [vmem:[%s1 + $0xd0] sm:$0xff]
    %v171 = vld [vmem:[%s1 + $0xd8] sm:$0xff]
    %v172 = vld [vmem:[%s1 + $0xe0] sm:$0xff]
    %v173 = vld [vmem:[%s1 + $0xe8] sm:$0xff]
    %v174 = vld [vmem:[%s1 + $0xf0] sm:$0xff]
    %v175 = vld [vmem:[%s1 + $0xf8] sm:$0xff]
    %v176 = vld [vmem:[%s1 + $0x100] sm:$0xff]
    %v177 = vld [vmem:[%s1 + $0x108] sm:$0xff]
    %v178 = vld [vmem:[%s1 + $0x110] sm:$0xff]
    %v179 = vld [vmem:[%s1 + $0x118] sm:$0xff]
    %v180 = vld [vmem:[%s1 + $0x120] sm:$0xff]
    %v181 = vld [vmem:[%s1 + $0x128] sm:$0xff]
    %v182 = vld [vmem:[%s1 + $0x130] sm:$0xff]
    %v183 = vld [vmem:[%s1 + $0x138] sm:$0xff]
    %v184 = vld [vmem:[%s1 + $0x140] sm:$0xff]
    %v185 = vld [vmem:[%s1 + $0x148] sm:$0xff]
    %v186 = vld [vmem:[%s1 + $0x150] sm:$0xff]
    %v187 = vld [vmem:[%s1 + $0x158] sm:$0xff]
    %v188 = vld [vmem:[%s1 + $0x160] sm:$0xff]
    %v189 = vld [vmem:[%s1 + $0x168] sm:$0xff]
    %v190 = vld [vmem:[%s1 + $0x170] sm:$0xff]
    %v191 = vld [vmem:[%s1 + $0x178] sm:$0xff]
    %v192 = vld [vmem:[%s1 + $0x180] sm:$0xff]
    %v193 = vld [vmem:[%s1 + $0x188] sm:$0xff]
    %v194 = vld [vmem:[%s1 + $0x190] sm:$0xff]
    %v195 = vld [vmem:[%s1 + $0x198] sm:$0xff]
    %v196 = vld [vmem:[%s1 + $0x1a0] sm:$0xff]
    %v197 = vld [vmem:[%s1 + $0x1a8] sm:$0xff]
    %v198 = vld [vmem:[%s1 + $0x1b0] sm:$0xff]
    %v199 = vld [vmem:[%s1 + $0x1b8] sm:$0xff]
    %v200 = vld [vmem:[%s1 + $0x1c0] sm:$0xff]
    %v201 = vld [vmem:[%s1 + $0x1c8] sm:$0xff]
    %v202 = vld [vmem:[%s1 + $0x1d0] sm:$0xff]
    %v203 = vld [vmem:[%s1 + $0x1d8] sm:$0xff]
    %v204 = vld [vmem:[%s1 + $0x1e0] sm:$0xff]
    %v205 = vld [vmem:[%s1 + $0x1e8] sm:$0xff]
    %v206 = vld [vmem:[%s1 + $0x1f0] sm:$0xff]
    %v207 = vld [vmem:[%s1 + $0x1f8] sm:$0xff]
    %v208 = vld [vmem:[%s1 + $0x200] sm:$0xff]
    %v209 = vld [vmem:[%s1 + $0x208] sm:$0xff]
    %v210 = vld [vmem:[%s1 + $0x210] sm:$0xff]
    %v211 = vld [vmem:[%s1 + $0x218] sm:$0xff]
    %v212 = vld [vmem:[%s1 + $0x220] sm:$0xff]
    %v213 = vld [vmem:[%s1 + $0x228] sm:$0xff]
    %v214 = vld [vmem:[%s1 + $0x230] sm:$0xff]
    %v215 = vld [vmem:[%s1 + $0x238] sm:$0xff]
    %v216 = vld [vmem:[%s1 + $0x240] sm:$0xff]
    %v217 = vld [vmem:[%s1 + $0x248] sm:$0xff]
    %v218 = vld [vmem:[%s1 + $0x250] sm:$0xff]
    %v219 = vld [vmem:[%s1 + $0x258] sm:$0xff]
    %v220 = vld [vmem:[%s1 + $0x260] sm:$0xff]
    %v221 = vld [vmem:[%s1 + $0x268] sm:$0xff]
    %v222 = vld [vmem:[%s1 + $0x270] sm:$0xff]
    %v223 = vld [vmem:[%s1 + $0x278] sm:$0xff]
    %v224 = vld [vmem:[%s1 + $0x280] sm:$0xff]
    %v225 = vld [vmem:[%s1 + $0x288] sm:$0xff]
    %v226 = vld [vmem:[%s1 + $0x290] sm:$0xff]
    %v227 = vld [vmem:[%s1 + $0x298] sm:$0xff]
    %v228 = vld [vmem:[%s1 + $0x2a0] sm:$0xff]
    %v229 = vld [vmem:[%s1 + $0x2a8] sm:$0xff]
    %v230 = vld [vmem:[%s1 + $0x2b0] sm:$0xff]
    %v231 = vld [vmem:[%s1 + $0x2b8] sm:$0xff]
    %v232 = vld [vmem:[%s1 + $0x2c0] sm:$0xff]
    %v233 = vld [vmem:[%s1 + $0x2c8] sm:$0xff]
    %v234 = vld [vmem:[%s1 + $0x2d0] sm:$0xff]
    %v235 = vld [vmem:[%s1 + $0x2d8] sm:$0xff]
    %v236 = vld [vmem:[%s1 + $0x2e0] sm:$0xff]
    %v237 = vld [vmem:[%s1 + $0x2e8] sm:$0xff]
    %v238 = vld [vmem:[%s1 + $0x2f0] sm:$0xff]
    %v239 = vld [vmem:[%s1 + $0x2f8] sm:$0xff]
    %v240 = vld [vmem:[%s1 + $0x300] sm:$0xff]
    %v241 = vld [vmem:[%s1 + $0x308] sm:$0xff]
    %v242 = vld [vmem:[%s1 + $0x310] sm:$0xff]
    %v243 = vld [vmem:[%s1 + $0x318] sm:$0xff]
    %v244 = vld [vmem:[%s1 + $0x320] sm:$0xff]
    %v245 = vld [vmem:[%s1 + $0x328] sm:$0xff]
    %v246 = vld [vmem:[%s1 + $0x330] sm:$0xff]
    %v247 = vld [vmem:[%s1 + $0x338] sm:$0xff]
    %v248 = vld [vmem:[%s1 + $0x340] sm:$0xff]
    %v249 = vld [vmem:[%s1 + $0x348] sm:$0xff]
    %v250 = vld [vmem:[%s1 + $0x350] sm:$0xff]
    %v251 = vld [vmem:[%s1 + $0x358] sm:$0xff]
    %v252 = vld [vmem:[%s1 + $0x360] sm:$0xff]
    %v253 = vld [vmem:[%s1 + $0x368] sm:$0xff]
    %v254 = vld [vmem:[%s1 + $0x370] sm:$0xff]
    %v255 = vld [vmem:[%s1 + $0x378] sm:$0xff]
    %v256 = vld [vmem:[%s1 + $0x380] sm:$0xff]
    %v257 = vld [vmem:[%s1 + $0x388] sm:$0xff]
    %v258 = vld [vmem:[%s1 + $0x390] sm:$0xff]
    %v259 = vld [vmem:[%s1 + $0x398] sm:$0xff]
    %v260 = vld [vmem:[%s1 + $0x3a0] sm:$0xff]
    %v261 = vld [vmem:[%s1 + $0x3a8] sm:$0xff]
    %v262 = vld [vmem:[%s1 + $0x3b0] sm:$0xff]
    %v263 = vld [vmem:[%s1 + $0x3b8] sm:$0xff]
    %v264 = vld [vmem:[%s1 + $0x3c0] sm:$0xff]
    %v265 = vld [vmem:[%s1 + $0x3c8] sm:$0xff]
    %v266 = vld [vmem:[%s1 + $0x3d0] sm:$0xff]
    %v267 = vld [vmem:[%s1 + $0x3d8] sm:$0xff]
    %v268 = vld [vmem:[%s1 + $0x3e0] sm:$0xff]
    %v269 = vld [vmem:[%s1 + $0x3e8] sm:$0xff]
    %v270 = vld [vmem:[%s1 + $0x3f0] sm:$0xff]
    %v271 = vld [vmem:[%s1 + $0x3f8] sm:$0xff]
    %v272 = vld [vmem:[%s1 + $0x400] sm:$0xff]
    %v273 = vld [vmem:[%s1 + $0x408] sm:$0xff]
    %v274 = vld [vmem:[%s1 + $0x410] sm:$0xff]
    %v275 = vld [vmem:[%s1 + $0x418] sm:$0xff]
    %v276 = vld [vmem:[%s1 + $0x420] sm:$0xff]
    %v277 = vld [vmem:[%s1 + $0x428] sm:$0xff]
    %v278 = vld [vmem:[%s1 + $0x430] sm:$0xff]
    %v279 = vld [vmem:[%s1 + $0x438] sm:$0xff]
    %v280 = vld [vmem:[%s1 + $0x440] sm:$0xff]
    %v281 = vld [vmem:[%s1 + $0x448] sm:$0xff]
    %v282 = vld [vmem:[%s1 + $0x450] sm:$0xff]
    %v283 = vld [vmem:[%s1 + $0x458] sm:$0xff]
    %v284 = vld [vmem:[%s1 + $0x460] sm:$0xff]
    %v285 = vld [vmem:[%s1 + $0x468] sm:$0xff]
    %v286 = vld [vmem:[%s1 + $0x470] sm:$0xff]
    %v287 = vld [vmem:[%s1 + $0x478] sm:$0xff]
    %v288 = vld [vmem:[%s1 + $0x480] sm:$0xff]
    %v289 = vld [vmem:[%s1 + $0x488] sm:$0xff]
    %v290 = vld [vmem:[%s1 + $0x490] sm:$0xff]
    %v291 = vld [vmem:[%s1 + $0x498] sm:$0xff]
    %v292 = vld [vmem:[%s1 + $0x4a0] sm:$0xff]
    %v293 = vld [vmem:[%s1 + $0x4a8] sm:$0xff]
    %v294 = vld [vmem:[%s1 + $0x4b0] sm:$0xff]
    %v295 = vld [vmem:[%s1 + $0x4b8] sm:$0xff]
    %v296 = vld [vmem:[%s1 + $0x4c0] sm:$0xff]
    %v297 = vld [vmem:[%s1 + $0x4c8] sm:$0xff]
    %v298 = vld [vmem:[%s1 + $0x4d0] sm:$0xff]
    %v299 = vld [vmem:[%s1 + $0x4d8] sm:$0xff]
    %v300 = vld [vmem:[%s1 + $0x4e0] sm:$0xff]
    %v301 = vld [vmem:[%s1 + $0x4e8] sm:$0xff]
    %v302 = vld [vmem:[%s1 + $0x4f0] sm:$0xff]
    %v303 = vld [vmem:[%s1 + $0x4f8] sm:$0xff]
    %v304 = vld [vmem:[%s1 + $0x500] sm:$0xff]
    %v305 = vld [vmem:[%s1 + $0x508] sm:$0xff]
    %v306 = vld [vmem:[%s1 + $0x510] sm:$0xff]
    %v307 = vld [vmem:[%s1 + $0x518] sm:$0xff]
    %v308 = vld [vmem:[%s1 + $0x520] sm:$0xff]
    %v309 = vld [vmem:[%s1 + $0x528] sm:$0xff]
    %v310 = vld [vmem:[%s1 + $0x530] sm:$0xff]
    %v311 = vld [vmem:[%s1 + $0x538] sm:$0xff]
    %v312 = vld [vmem:[%s1 + $0x540] sm:$0xff]
    %v313 = vld [vmem:[%s1 + $0x548] sm:$0xff]
    %v314 = vld [vmem:[%s1 + $0x550] sm:$0xff]
    %v315 = vld [vmem:[%s1 + $0x558] sm:$0xff]
    %v316 = vld [vmem:[%s1 + $0x560] sm:$0xff]
    %v317 = vld [vmem:[%s1 + $0x568] sm:$0xff]
    %v318 = vld [vmem:[%s1 + $0x570] sm:$0xff]
    %v319 = vld [vmem:[%s1 + $0x578] sm:$0xff]
    %v320 = vld [vmem:[%s1 + $0x580] sm:$0xff]
    %v321 = vld [vmem:[%s1 + $0x588] sm:$0xff]
    %v322 = vld [vmem:[%s1 + $0x590] sm:$0xff]
    %v323 = vld [vmem:[%s1 + $0x598] sm:$0xff]
    %v324 = vld [vmem:[%s1 + $0x5a0] sm:$0xff]
    %v325 = vld [vmem:[%s1 + $0x5a8] sm:$0xff]
    %v326 = vld [vmem:[%s1 + $0x5b0] sm:$0xff]
    %v327 = vld [vmem:[%s1 + $0x5b8] sm:$0xff]
    %v328 = vld [vmem:[%s1 + $0x5c0] sm:$0xff]
    %v329 = vld [vmem:[%s1 + $0x5c8] sm:$0xff]
    %v330 = vld [vmem:[%s1 + $0x5d0] sm:$0xff]
    %v331 = vld [vmem:[%s1 + $0x5d8] sm:$0xff]
    %v332 = vld [vmem:[%s1 + $0x5e0] sm:$0xff]
    %v333 = vld [vmem:[%s1 + $0x5e8] sm:$0xff]
    %v334 = vld [vmem:[%s1 + $0x5f0] sm:$0xff]
    %v335 = vld [vmem:[%s1 + $0x5f8] sm:$0xff]
    %v336 = vld [vmem:[%s1 + $0x600] sm:$0xff]
    %v337 = vld [vmem:[%s1 + $0x608] sm:$0xff]
    %v338 = vld [vmem:[%s1 + $0x610] sm:$0xff]
    %v339 = vld [vmem:[%s1 + $0x618] sm:$0xff]
    %v340 = vld [vmem:[%s1 + $0x620] sm:$0xff]
    %v341 = vld [vmem:[%s1 + $0x628] sm:$0xff]
    %v342 = vld [vmem:[%s1 + $0x630] sm:$0xff]
    %v343 = vld [vmem:[%s1 + $0x638] sm:$0xff]
    %v344 = vld [vmem:[%s1 + $0x640] sm:$0xff]
    %v345 = vld [vmem:[%s1 + $0x648] sm:$0xff]
    %v346 = vld [vmem:[%s1 + $0x650] sm:$0xff]
    %v347 = vld [vmem:[%s1 + $0x658] sm:$0xff]
    %v348 = vld [vmem:[%s1 + $0x660] sm:$0xff]
    %v349 = vld [vmem:[%s1 + $0x668] sm:$0xff]
    %v350 = vld [vmem:[%s1 + $0x670] sm:$0xff]
    %v351 = vld [vmem:[%s1 + $0x678] sm:$0xff]
    %v352 = vld [vmem:[%s1 + $0x680] sm:$0xff]
    %v353 = vld [vmem:[%s1 + $0x688] sm:$0xff]
    %v354 = vld [vmem:[%s1 + $0x690] sm:$0xff]
    %v355 = vld [vmem:[%s1 + $0x698] sm:$0xff]
    %v356 = vld [vmem:[%s1 + $0x6a0] sm:$0xff]
    %v357 = vld [vmem:[%s1 + $0x6a8] sm:$0xff]
    %v358 = vld [vmem:[%s1 + $0x6b0] sm:$0xff]
    %v359 = vld [vmem:[%s1 + $0x6b8] sm:$0xff]
    %v360 = vld [vmem:[%s1 + $0x6c0] sm:$0xff]
    %v361 = vld [vmem:[%s1 + $0x6c8] sm:$0xff]
    %v362 = vld [vmem:[%s1 + $0x6d0] sm:$0xff]
    %v363 = vld [vmem:[%s1 + $0x6d8] sm:$0xff]
    %v364 = vld [vmem:[%s1 + $0x6e0] sm:$0xff]
    %v365 = vld [vmem:[%s1 + $0x6e8] sm:$0xff]
    %v366 = vld [vmem:[%s1 + $0x6f0] sm:$0xff]
    %v367 = vld [vmem:[%s1 + $0x6f8] sm:$0xff]
    %v368 = vld [vmem:[%s1 + $0x700] sm:$0xff]
    %v369 = vld [vmem:[%s1 + $0x708] sm:$0xff]
    %v370 = vld [vmem:[%s1 + $0x710] sm:$0xff]
    %v371 = vld [vmem:[%s1 + $0x718] sm:$0xff]
    %v372 = vld [vmem:[%s1 + $0x720] sm:$0xff]
    %v373 = vld [vmem:[%s1 + $0x728] sm:$0xff]
    %v374 = vld [vmem:[%s1 + $0x730] sm:$0xff]
    %v375 = vld [vmem:[%s1 + $0x738] sm:$0xff]
    %v376 = vld [vmem:[%s1 + $0x740] sm:$0xff]
    %v377 = vld [vmem:[%s1 + $0x748] sm:$0xff]
    %v378 = vld [vmem:[%s1 + $0x750] sm:$0xff]
    %v379 = vld [vmem:[%s1 + $0x758] sm:$0xff]
    %v380 = vld [vmem:[%s1 + $0x760] sm:$0xff]
    %v381 = vld [vmem:[%s1 + $0x768] sm:$0xff]
    %v382 = vld [vmem:[%s1 + $0x770] sm:$0xff]
    %v383 = vld [vmem:[%s1 + $0x778] sm:$0xff]
    %v384 = vld [vmem:[%s1 + $0x780] sm:$0xff]
    %v385 = vld [vmem:[%s1 + $0x788] sm:$0xff]
    %v386 = vld [vmem:[%s1 + $0x790] sm:$0xff]
    %v387 = vld [vmem:[%s1 + $0x798] sm:$0xff]
    %v388 = vld [vmem:[%s1 + $0x7a0] sm:$0xff]
    %v389 = vld [vmem:[%s1 + $0x7a8] sm:$0xff]
    %v390 = vld [vmem:[%s1 + $0x7b0] sm:$0xff]
    %v391 = vld [vmem:[%s1 + $0x7b8] sm:$0xff]
    %v392 = vld [vmem:[%s1 + $0x7c0] sm:$0xff]
    %v393 = vld [vmem:[%s1 + $0x7c8] sm:$0xff]
    %v394 = vld [vmem:[%s1 + $0x7d0] sm:$0xff]
    %v395 = vld [vmem:[%s1 + $0x7d8] sm:$0xff]
    %v396 = vld [vmem:[%s1 + $0x7e0] sm:$0xff]
    %v397 = vld [vmem:[%s1 + $0x7e8] sm:$0xff]
    %v398 = vld [vmem:[%s1 + $0x7f0] sm:$0xff]
    %v399 = vld [vmem:[%s1 + $0x7f8] sm:$0xff]
    %v656 = vunpack.c.l.b16 %v144
    %v657 = vunpack.c.h.b16 %v144
    %v658 = vunpack.c.l.b16 %v145
    %v659 = vunpack.c.h.b16 %v145
    %v660 = vunpack.c.l.b16 %v146
    %v661 = vunpack.c.h.b16 %v146
    %v662 = vunpack.c.l.b16 %v147
    %v663 = vunpack.c.h.b16 %v147
    %v664 = vunpack.c.l.b16 %v148
    %v665 = vunpack.c.h.b16 %v148
    %v666 = vunpack.c.l.b16 %v149
    %v667 = vunpack.c.h.b16 %v149
    %v668 = vunpack.c.l.b16 %v150
    %v669 = vunpack.c.h.b16 %v150
    %v670 = vunpack.c.l.b16 %v151
    %v671 = vunpack.c.h.b16 %v151
    %v672 = vunpack.c.l.b16 %v152
    %v673 = vunpack.c.h.b16 %v152
    %v674 = vunpack.c.l.b16 %v153
    %v675 = vunpack.c.h.b16 %v153
    %v676 = vunpack.c.l.b16 %v154
    %v677 = vunpack.c.h.b16 %v154
    %v678 = vunpack.c.l.b16 %v155
    %v679 = vunpack.c.h.b16 %v155
    %v680 = vunpack.c.l.b16 %v156
    %v681 = vunpack.c.h.b16 %v156
    %v682 = vunpack.c.l.b16 %v157
    %v683 = vunpack.c.h.b16 %v157
    %v684 = vunpack.c.l.b16 %v158
    %v685 = vunpack.c.h.b16 %v158
    %v686 = vunpack.c.l.b16 %v159
    %v687 = vunpack.c.h.b16 %v159
    %v688 = vunpack.c.l.b16 %v160
    %v689 = vunpack.c.h.b16 %v160
    %v690 = vunpack.c.l.b16 %v161
    %v691 = vunpack.c.h.b16 %v161
    %v692 = vunpack.c.l.b16 %v162
    %v693 = vunpack.c.h.b16 %v162
    %v694 = vunpack.c.l.b16 %v163
    %v695 = vunpack.c.h.b16 %v163
    %v696 = vunpack.c.l.b16 %v164
    %v697 = vunpack.c.h.b16 %v164
    %v698 = vunpack.c.l.b16 %v165
    %v699 = vunpack.c.h.b16 %v165
    %v700 = vunpack.c.l.b16 %v166
    %v701 = vunpack.c.h.b16 %v166
    %v702 = vunpack.c.l.b16 %v167
    %v703 = vunpack.c.h.b16 %v167
    %v704 = vunpack.c.l.b16 %v168
    %v705 = vunpack.c.h.b16 %v168
    %v706 = vunpack.c.l.b16 %v169
    %v707 = vunpack.c.h.b16 %v169
    %v708 = vunpack.c.l.b16 %v170
    %v709 = vunpack.c.h.b16 %v170
    %v710 = vunpack.c.l.b16 %v171
    %v711 = vunpack.c.h.b16 %v171
    %v712 = vunpack.c.l.b16 %v172
    %v713 = vunpack.c.h.b16 %v172
    %v714 = vunpack.c.l.b16 %v173
    %v715 = vunpack.c.h.b16 %v173
    %v716 = vunpack.c.l.b16 %v174
    %v717 = vunpack.c.h.b16 %v174
    %v718 = vunpack.c.l.b16 %v175
    %v719 = vunpack.c.h.b16 %v175
    %v720 = vunpack.c.l.b16 %v176
    %v721 = vunpack.c.h.b16 %v176
    %v722 = vunpack.c.l.b16 %v177
    %v723 = vunpack.c.h.b16 %v177
    %v724 = vunpack.c.l.b16 %v178
    %v725 = vunpack.c.h.b16 %v178
    %v726 = vunpack.c.l.b16 %v179
    %v727 = vunpack.c.h.b16 %v179
    %v728 = vunpack.c.l.b16 %v180
    %v729 = vunpack.c.h.b16 %v180
    %v730 = vunpack.c.l.b16 %v181
    %v731 = vunpack.c.h.b16 %v181
    %v732 = vunpack.c.l.b16 %v182
    %v733 = vunpack.c.h.b16 %v182
    %v734 = vunpack.c.l.b16 %v183
    %v735 = vunpack.c.h.b16 %v183
    %v736 = vunpack.c.l.b16 %v184
    %v737 = vunpack.c.h.b16 %v184
    %v738 = vunpack.c.l.b16 %v185
    %v739 = vunpack.c.h.b16 %v185
    %v740 = vunpack.c.l.b16 %v186
    %v741 = vunpack.c.h.b16 %v186
    %v742 = vunpack.c.l.b16 %v187
    %v743 = vunpack.c.h.b16 %v187
    %v744 = vunpack.c.l.b16 %v188
    %v745 = vunpack.c.h.b16 %v188
    %v746 = vunpack.c.l.b16 %v189
    %v747 = vunpack.c.h.b16 %v189
    %v748 = vunpack.c.l.b16 %v190
    %v749 = vunpack.c.h.b16 %v190
    %v750 = vunpack.c.l.b16 %v191
    %v751 = vunpack.c.h.b16 %v191
    %v752 = vunpack.c.l.b16 %v192
    %v753 = vunpack.c.h.b16 %v192
    %v754 = vunpack.c.l.b16 %v193
    %v755 = vunpack.c.h.b16 %v193
    %v756 = vunpack.c.l.b16 %v194
    %v757 = vunpack.c.h.b16 %v194
    %v758 = vunpack.c.l.b16 %v195
    %v759 = vunpack.c.h.b16 %v195
    %v760 = vunpack.c.l.b16 %v196
    %v761 = vunpack.c.h.b16 %v196
    %v762 = vunpack.c.l.b16 %v197
    %v763 = vunpack.c.h.b16 %v197
    %v764 = vunpack.c.l.b16 %v198
    %v765 = vunpack.c.h.b16 %v198
    %v766 = vunpack.c.l.b16 %v199
    %v767 = vunpack.c.h.b16 %v199
    %v768 = vunpack.c.l.b16 %v200
    %v769 = vunpack.c.h.b16 %v200
    %v770 = vunpack.c.l.b16 %v201
    %v771 = vunpack.c.h.b16 %v201
    %v772 = vunpack.c.l.b16 %v202
    %v773 = vunpack.c.h.b16 %v202
    %v774 = vunpack.c.l.b16 %v203
    %v775 = vunpack.c.h.b16 %v203
    %v776 = vunpack.c.l.b16 %v204
    %v777 = vunpack.c.h.b16 %v204
    %v778 = vunpack.c.l.b16 %v205
    %v779 = vunpack.c.h.b16 %v205
    %v780 = vunpack.c.l.b16 %v206
    %v781 = vunpack.c.h.b16 %v206
    %v782 = vunpack.c.l.b16 %v207
    %v783 = vunpack.c.h.b16 %v207
    %v784 = vunpack.c.l.b16 %v208
    %v785 = vunpack.c.h.b16 %v208
    %v786 = vunpack.c.l.b16 %v209
    %v787 = vunpack.c.h.b16 %v209
    %v788 = vunpack.c.l.b16 %v210
    %v789 = vunpack.c.h.b16 %v210
    %v790 = vunpack.c.l.b16 %v211
    %v791 = vunpack.c.h.b16 %v211
    %v792 = vunpack.c.l.b16 %v212
    %v793 = vunpack.c.h.b16 %v212
    %v794 = vunpack.c.l.b16 %v213
    %v795 = vunpack.c.h.b16 %v213
    %v796 = vunpack.c.l.b16 %v214
    %v797 = vunpack.c.h.b16 %v214
    %v798 = vunpack.c.l.b16 %v215
    %v799 = vunpack.c.h.b16 %v215
    %v800 = vunpack.c.l.b16 %v216
    %v801 = vunpack.c.h.b16 %v216
    %v802 = vunpack.c.l.b16 %v217
    %v803 = vunpack.c.h.b16 %v217
    %v804 = vunpack.c.l.b16 %v218
    %v805 = vunpack.c.h.b16 %v218
    %v806 = vunpack.c.l.b16 %v219
    %v807 = vunpack.c.h.b16 %v219
    %v808 = vunpack.c.l.b16 %v220
    %v809 = vunpack.c.h.b16 %v220
    %v810 = vunpack.c.l.b16 %v221
    %v811 = vunpack.c.h.b16 %v221
    %v812 = vunpack.c.l.b16 %v222
    %v813 = vunpack.c.h.b16 %v222
    %v814 = vunpack.c.l.b16 %v223
    %v815 = vunpack.c.h.b16 %v223
    %v816 = vunpack.c.l.b16 %v224
    %v817 = vunpack.c.h.b16 %v224
    %v818 = vunpack.c.l.b16 %v225
    %v819 = vunpack.c.h.b16 %v225
    %v820 = vunpack.c.l.b16 %v226
    %v821 = vunpack.c.h.b16 %v226
    %v822 = vunpack.c.l.b16 %v227
    %v823 = vunpack.c.h.b16 %v227
    %v824 = vunpack.c.l.b16 %v228
    %v825 = vunpack.c.h.b16 %v228
    %v826 = vunpack.c.l.b16 %v229
    %v827 = vunpack.c.h.b16 %v229
    %v828 = vunpack.c.l.b16 %v230
    %v829 = vunpack.c.h.b16 %v230
    %v830 = vunpack.c.l.b16 %v231
    %v831 = vunpack.c.h.b16 %v231
    %v832 = vunpack.c.l.b16 %v232
    %v833 = vunpack.c.h.b16 %v232
    %v834 = vunpack.c.l.b16 %v233
    %v835 = vunpack.c.h.b16 %v233
    %v836 = vunpack.c.l.b16 %v234
    %v837 = vunpack.c.h.b16 %v234
    %v838 = vunpack.c.l.b16 %v235
    %v839 = vunpack.c.h.b16 %v235
    %v840 = vunpack.c.l.b16 %v236
    %v841 = vunpack.c.h.b16 %v236
    %v842 = vunpack.c.l.b16 %v237
    %v843 = vunpack.c.h.b16 %v237
    %v844 = vunpack.c.l.b16 %v238
    %v845 = vunpack.c.h.b16 %v238
    %v846 = vunpack.c.l.b16 %v239
    %v847 = vunpack.c.h.b16 %v239
    %v848 = vunpack.c.l.b16 %v240
    %v849 = vunpack.c.h.b16 %v240
    %v850 = vunpack.c.l.b16 %v241
    %v851 = vunpack.c.h.b16 %v241
    %v852 = vunpack.c.l.b16 %v242
    %v853 = vunpack.c.h.b16 %v242
    %v854 = vunpack.c.l.b16 %v243
    %v855 = vunpack.c.h.b16 %v243
    %v856 = vunpack.c.l.b16 %v244
    %v857 = vunpack.c.h.b16 %v244
    %v858 = vunpack.c.l.b16 %v245
    %v859 = vunpack.c.h.b16 %v245
    %v860 = vunpack.c.l.b16 %v246
    %v861 = vunpack.c.h.b16 %v246
    %v862 = vunpack.c.l.b16 %v247
    %v863 = vunpack.c.h.b16 %v247
    %v864 = vunpack.c.l.b16 %v248
    %v865 = vunpack.c.h.b16 %v248
    %v866 = vunpack.c.l.b16 %v249
    %v867 = vunpack.c.h.b16 %v249
    %v868 = vunpack.c.l.b16 %v250
    %v869 = vunpack.c.h.b16 %v250
    %v870 = vunpack.c.l.b16 %v251
    %v871 = vunpack.c.h.b16 %v251
    %v872 = vunpack.c.l.b16 %v252
    %v873 = vunpack.c.h.b16 %v252
    %v874 = vunpack.c.l.b16 %v253
    %v875 = vunpack.c.h.b16 %v253
    %v876 = vunpack.c.l.b16 %v254
    %v877 = vunpack.c.h.b16 %v254
    %v878 = vunpack.c.l.b16 %v255
    %v879 = vunpack.c.h.b16 %v255
    %v880 = vunpack.c.l.b16 %v256
    %v881 = vunpack.c.h.b16 %v256
    %v882 = vunpack.c.l.b16 %v257
    %v883 = vunpack.c.h.b16 %v257
    %v884 = vunpack.c.l.b16 %v258
    %v885 = vunpack.c.h.b16 %v258
    %v886 = vunpack.c.l.b16 %v259
    %v887 = vunpack.c.h.b16 %v259
    %v888 = vunpack.c.l.b16 %v260
    %v889 = vunpack.c.h.b16 %v260
    %v890 = vunpack.c.l.b16 %v261
    %v891 = vunpack.c.h.b16 %v261
    %v892 = vunpack.c.l.b16 %v262
    %v893 = vunpack.c.h.b16 %v262
    %v894 = vunpack.c.l.b16 %v263
    %v895 = vunpack.c.h.b16 %v263
    %v896 = vunpack.c.l.b16 %v264
    %v897 = vunpack.c.h.b16 %v264
    %v898 = vunpack.c.l.b16 %v265
    %v899 = vunpack.c.h.b16 %v265
    %v900 = vunpack.c.l.b16 %v266
    %v901 = vunpack.c.h.b16 %v266
    %v902 = vunpack.c.l.b16 %v267
    %v903 = vunpack.c.h.b16 %v267
    %v904 = vunpack.c.l.b16 %v268
    %v905 = vunpack.c.h.b16 %v268
    %v906 = vunpack.c.l.b16 %v269
    %v907 = vunpack.c.h.b16 %v269
    %v908 = vunpack.c.l.b16 %v270
    %v909 = vunpack.c.h.b16 %v270
    %v910 = vunpack.c.l.b16 %v271
    %v911 = vunpack.c.h.b16 %v271
    %v912 = vunpack.c.l.b16 %v272
    %v913 = vunpack.c.h.b16 %v272
    %v914 = vunpack.c.l.b16 %v273
    %v915 = vunpack.c.h.b16 %v273
    %v916 = vunpack.c.l.b16 %v274
    %v917 = vunpack.c.h.b16 %v274
    %v918 = vunpack.c.l.b16 %v275
    %v919 = vunpack.c.h.b16 %v275
    %v920 = vunpack.c.l.b16 %v276
    %v921 = vunpack.c.h.b16 %v276
    %v922 = vunpack.c.l.b16 %v277
    %v923 = vunpack.c.h.b16 %v277
    %v924 = vunpack.c.l.b16 %v278
    %v925 = vunpack.c.h.b16 %v278
    %v926 = vunpack.c.l.b16 %v279
    %v927 = vunpack.c.h.b16 %v279
    %v928 = vunpack.c.l.b16 %v280
    %v929 = vunpack.c.h.b16 %v280
    %v930 = vunpack.c.l.b16 %v281
    %v931 = vunpack.c.h.b16 %v281
    %v932 = vunpack.c.l.b16 %v282
    %v933 = vunpack.c.h.b16 %v282
    %v934 = vunpack.c.l.b16 %v283
    %v935 = vunpack.c.h.b16 %v283
    %v936 = vunpack.c.l.b16 %v284
    %v937 = vunpack.c.h.b16 %v284
    %v938 = vunpack.c.l.b16 %v285
    %v939 = vunpack.c.h.b16 %v285
    %v940 = vunpack.c.l.b16 %v286
    %v941 = vunpack.c.h.b16 %v286
    %v942 = vunpack.c.l.b16 %v287
    %v943 = vunpack.c.h.b16 %v287
    %v944 = vunpack.c.l.b16 %v288
    %v945 = vunpack.c.h.b16 %v288
    %v946 = vunpack.c.l.b16 %v289
    %v947 = vunpack.c.h.b16 %v289
    %v948 = vunpack.c.l.b16 %v290
    %v949 = vunpack.c.h.b16 %v290
    %v950 = vunpack.c.l.b16 %v291
    %v951 = vunpack.c.h.b16 %v291
    %v952 = vunpack.c.l.b16 %v292
    %v953 = vunpack.c.h.b16 %v292
    %v954 = vunpack.c.l.b16 %v293
    %v955 = vunpack.c.h.b16 %v293
    %v956 = vunpack.c.l.b16 %v294
    %v957 = vunpack.c.h.b16 %v294
    %v958 = vunpack.c.l.b16 %v295
    %v959 = vunpack.c.h.b16 %v295
    %v960 = vunpack.c.l.b16 %v296
    %v961 = vunpack.c.h.b16 %v296
    %v962 = vunpack.c.l.b16 %v297
    %v963 = vunpack.c.h.b16 %v297
    %v964 = vunpack.c.l.b16 %v298
    %v965 = vunpack.c.h.b16 %v298
    %v966 = vunpack.c.l.b16 %v299
    %v967 = vunpack.c.h.b16 %v299
    %v968 = vunpack.c.l.b16 %v300
    %v969 = vunpack.c.h.b16 %v300
    %v970 = vunpack.c.l.b16 %v301
    %v971 = vunpack.c.h.b16 %v301
    %v972 = vunpack.c.l.b16 %v302
    %v973 = vunpack.c.h.b16 %v302
    %v974 = vunpack.c.l.b16 %v303
    %v975 = vunpack.c.h.b16 %v303
    %v976 = vunpack.c.l.b16 %v304
    %v977 = vunpack.c.h.b16 %v304
    %v978 = vunpack.c.l.b16 %v305
    %v979 = vunpack.c.h.b16 %v305
    %v980 = vunpack.c.l.b16 %v306
    %v981 = vunpack.c.h.b16 %v306
    %v982 = vunpack.c.l.b16 %v307
    %v983 = vunpack.c.h.b16 %v307
    %v984 = vunpack.c.l.b16 %v308
    %v985 = vunpack.c.h.b16 %v308
    %v986 = vunpack.c.l.b16 %v309
    %v987 = vunpack.c.h.b16 %v309
    %v988 = vunpack.c.l.b16 %v310
    %v989 = vunpack.c.h.b16 %v310
    %v990 = vunpack.c.l.b16 %v311
    %v991 = vunpack.c.h.b16 %v311
    %v992 = vunpack.c.l.b16 %v312
    %v993 = vunpack.c.h.b16 %v312
    %v994 = vunpack.c.l.b16 %v313
    %v995 = vunpack.c.h.b16 %v313
    %v996 = vunpack.c.l.b16 %v314
    %v997 = vunpack.c.h.b16 %v314
    %v998 = vunpack.c.l.b16 %v315
    %v999 = vunpack.c.h.b16 %v315
    %v1000 = vunpack.c.l.b16 %v316
    %v1001 = vunpack.c.h.b16 %v316
    %v1002 = vunpack.c.l.b16 %v317
    %v1003 = vunpack.c.h.b16 %v317
    %v1004 = vunpack.c.l.b16 %v318
    %v1005 = vunpack.c.h.b16 %v318
    %v1006 = vunpack.c.l.b16 %v319
    %v1007 = vunpack.c.h.b16 %v319
    %v1008 = vunpack.c.l.b16 %v320
    %v1009 = vunpack.c.h.b16 %v320
    %v1010 = vunpack.c.l.b16 %v321
    %v1011 = vunpack.c.h.b16 %v321
    %v1012 = vunpack.c.l.b16 %v322
    %v1013 = vunpack.c.h.b16 %v322
    %v1014 = vunpack.c.l.b16 %v323
    %v1015 = vunpack.c.h.b16 %v323
    %v1016 = vunpack.c.l.b16 %v324
    %v1017 = vunpack.c.h.b16 %v324
    %v1018 = vunpack.c.l.b16 %v325
    %v1019 = vunpack.c.h.b16 %v325
    %v1020 = vunpack.c.l.b16 %v326
    %v1021 = vunpack.c.h.b16 %v326
    %v1022 = vunpack.c.l.b16 %v327
    %v1023 = vunpack.c.h.b16 %v327
    %v1024 = vunpack.c.l.b16 %v328
    %v1025 = vunpack.c.h.b16 %v328
    %v1026 = vunpack.c.l.b16 %v329
    %v1027 = vunpack.c.h.b16 %v329
    %v1028 = vunpack.c.l.b16 %v330
    %v1029 = vunpack.c.h.b16 %v330
    %v1030 = vunpack.c.l.b16 %v331
    %v1031 = vunpack.c.h.b16 %v331
    %v1032 = vunpack.c.l.b16 %v332
    %v1033 = vunpack.c.h.b16 %v332
    %v1034 = vunpack.c.l.b16 %v333
    %v1035 = vunpack.c.h.b16 %v333
    %v1036 = vunpack.c.l.b16 %v334
    %v1037 = vunpack.c.h.b16 %v334
    %v1038 = vunpack.c.l.b16 %v335
    %v1039 = vunpack.c.h.b16 %v335
    %v1040 = vunpack.c.l.b16 %v336
    %v1041 = vunpack.c.h.b16 %v336
    %v1042 = vunpack.c.l.b16 %v337
    %v1043 = vunpack.c.h.b16 %v337
    %v1044 = vunpack.c.l.b16 %v338
    %v1045 = vunpack.c.h.b16 %v338
    %v1046 = vunpack.c.l.b16 %v339
    %v1047 = vunpack.c.h.b16 %v339
    %v1048 = vunpack.c.l.b16 %v340
    %v1049 = vunpack.c.h.b16 %v340
    %v1050 = vunpack.c.l.b16 %v341
    %v1051 = vunpack.c.h.b16 %v341
    %v1052 = vunpack.c.l.b16 %v342
    %v1053 = vunpack.c.h.b16 %v342
    %v1054 = vunpack.c.l.b16 %v343
    %v1055 = vunpack.c.h.b16 %v343
    %v1056 = vunpack.c.l.b16 %v344
    %v1057 = vunpack.c.h.b16 %v344
    %v1058 = vunpack.c.l.b16 %v345
    %v1059 = vunpack.c.h.b16 %v345
    %v1060 = vunpack.c.l.b16 %v346
    %v1061 = vunpack.c.h.b16 %v346
    %v1062 = vunpack.c.l.b16 %v347
    %v1063 = vunpack.c.h.b16 %v347
    %v1064 = vunpack.c.l.b16 %v348
    %v1065 = vunpack.c.h.b16 %v348
    %v1066 = vunpack.c.l.b16 %v349
    %v1067 = vunpack.c.h.b16 %v349
    %v1068 = vunpack.c.l.b16 %v350
    %v1069 = vunpack.c.h.b16 %v350
    %v1070 = vunpack.c.l.b16 %v351
    %v1071 = vunpack.c.h.b16 %v351
    %v1072 = vunpack.c.l.b16 %v352
    %v1073 = vunpack.c.h.b16 %v352
    %v1074 = vunpack.c.l.b16 %v353
    %v1075 = vunpack.c.h.b16 %v353
    %v1076 = vunpack.c.l.b16 %v354
    %v1077 = vunpack.c.h.b16 %v354
    %v1078 = vunpack.c.l.b16 %v355
    %v1079 = vunpack.c.h.b16 %v355
    %v1080 = vunpack.c.l.b16 %v356
    %v1081 = vunpack.c.h.b16 %v356
    %v1082 = vunpack.c.l.b16 %v357
    %v1083 = vunpack.c.h.b16 %v357
    %v1084 = vunpack.c.l.b16 %v358
    %v1085 = vunpack.c.h.b16 %v358
    %v1086 = vunpack.c.l.b16 %v359
    %v1087 = vunpack.c.h.b16 %v359
    %v1088 = vunpack.c.l.b16 %v360
    %v1089 = vunpack.c.h.b16 %v360
    %v1090 = vunpack.c.l.b16 %v361
    %v1091 = vunpack.c.h.b16 %v361
    %v1092 = vunpack.c.l.b16 %v362
    %v1093 = vunpack.c.h.b16 %v362
    %v1094 = vunpack.c.l.b16 %v363
    %v1095 = vunpack.c.h.b16 %v363
    %v1096 = vunpack.c.l.b16 %v364
    %v1097 = vunpack.c.h.b16 %v364
    %v1098 = vunpack.c.l.b16 %v365
    %v1099 = vunpack.c.h.b16 %v365
    %v1100 = vunpack.c.l.b16 %v366
    %v1101 = vunpack.c.h.b16 %v366
    %v1102 = vunpack.c.l.b16 %v367
    %v1103 = vunpack.c.h.b16 %v367
    %v1104 = vunpack.c.l.b16 %v368
    %v1105 = vunpack.c.h.b16 %v368
    %v1106 = vunpack.c.l.b16 %v369
    %v1107 = vunpack.c.h.b16 %v369
    %v1108 = vunpack.c.l.b16 %v370
    %v1109 = vunpack.c.h.b16 %v370
    %v1110 = vunpack.c.l.b16 %v371
    %v1111 = vunpack.c.h.b16 %v371
    %v1112 = vunpack.c.l.b16 %v372
    %v1113 = vunpack.c.h.b16 %v372
    %v1114 = vunpack.c.l.b16 %v373
    %v1115 = vunpack.c.h.b16 %v373
    %v1116 = vunpack.c.l.b16 %v374
    %v1117 = vunpack.c.h.b16 %v374
    %v1118 = vunpack.c.l.b16 %v375
    %v1119 = vunpack.c.h.b16 %v375
    %v1120 = vunpack.c.l.b16 %v376
    %v1121 = vunpack.c.h.b16 %v376
    %v1122 = vunpack.c.l.b16 %v377
    %v1123 = vunpack.c.h.b16 %v377
    %v1124 = vunpack.c.l.b16 %v378
    %v1125 = vunpack.c.h.b16 %v378
    %v1126 = vunpack.c.l.b16 %v379
    %v1127 = vunpack.c.h.b16 %v379
    %v1128 = vunpack.c.l.b16 %v380
    %v1129 = vunpack.c.h.b16 %v380
    %v1130 = vunpack.c.l.b16 %v381
    %v1131 = vunpack.c.h.b16 %v381
    %v1132 = vunpack.c.l.b16 %v382
    %v1133 = vunpack.c.h.b16 %v382
    %v1134 = vunpack.c.l.b16 %v383
    %v1135 = vunpack.c.h.b16 %v383
    %v1136 = vunpack.c.l.b16 %v384
    %v1137 = vunpack.c.h.b16 %v384
    %v1138 = vunpack.c.l.b16 %v385
    %v1139 = vunpack.c.h.b16 %v385
    %v1140 = vunpack.c.l.b16 %v386
    %v1141 = vunpack.c.h.b16 %v386
    %v1142 = vunpack.c.l.b16 %v387
    %v1143 = vunpack.c.h.b16 %v387
    %v1144 = vunpack.c.l.b16 %v388
    %v1145 = vunpack.c.h.b16 %v388
    %v1146 = vunpack.c.l.b16 %v389
    %v1147 = vunpack.c.h.b16 %v389
    %v1148 = vunpack.c.l.b16 %v390
    %v1149 = vunpack.c.h.b16 %v390
    %v1150 = vunpack.c.l.b16 %v391
    %v1151 = vunpack.c.h.b16 %v391
    %v1152 = vunpack.c.l.b16 %v392
    %v1153 = vunpack.c.h.b16 %v392
    %v1154 = vunpack.c.l.b16 %v393
    %v1155 = vunpack.c.h.b16 %v393
    %v1156 = vunpack.c.l.b16 %v394
    %v1157 = vunpack.c.h.b16 %v394
    %v1158 = vunpack.c.l.b16 %v395
    %v1159 = vunpack.c.h.b16 %v395
    %v1160 = vunpack.c.l.b16 %v396
    %v1161 = vunpack.c.h.b16 %v396
    %v1162 = vunpack.c.l.b16 %v397
    %v1163 = vunpack.c.h.b16 %v397
    %v1164 = vunpack.c.l.b16 %v398
    %v1165 = vunpack.c.h.b16 %v398
    %v1166 = vunpack.c.l.b16 %v399
    %v1167 = vunpack.c.h.b16 %v399
    %v1168 = vpack.c.b16 %v660, %v656
    %v1169 = vpack.c.b16 %v661, %v657
    %v1170 = vpack.c.b16 %v662, %v658
    %v1171 = vpack.c.b16 %v663, %v659
    %v1172 = vpack.c.b16 %v668, %v664
    %v1173 = vpack.c.b16 %v669, %v665
    %v1174 = vpack.c.b16 %v670, %v666
    %v1175 = vpack.c.b16 %v671, %v667
    %v1176 = vpack.c.b16 %v676, %v672
    %v1177 = vpack.c.b16 %v677, %v673
    %v1178 = vpack.c.b16 %v678, %v674
    %v1179 = vpack.c.b16 %v679, %v675
    %v1180 = vpack.c.b16 %v684, %v680
    %v1181 = vpack.c.b16 %v685, %v681
    %v1182 = vpack.c.b16 %v686, %v682
    %v1183 = vpack.c.b16 %v687, %v683
    %v1184 = vpack.c.b16 %v692, %v688
    %v1185 = vpack.c.b16 %v693, %v689
    %v1186 = vpack.c.b16 %v694, %v690
    %v1187 = vpack.c.b16 %v695, %v691
    %v1188 = vpack.c.b16 %v700, %v696
    %v1189 = vpack.c.b16 %v701, %v697
    %v1190 = vpack.c.b16 %v702, %v698
    %v1191 = vpack.c.b16 %v703, %v699
    %v1192 = vpack.c.b16 %v708, %v704
    %v1193 = vpack.c.b16 %v709, %v705
    %v1194 = vpack.c.b16 %v710, %v706
    %v1195 = vpack.c.b16 %v711, %v707
    %v1196 = vpack.c.b16 %v716, %v712
    %v1197 = vpack.c.b16 %v717, %v713
    %v1198 = vpack.c.b16 %v718, %v714
    %v1199 = vpack.c.b16 %v719, %v715
    %v1200 = vpack.c.b16 %v724, %v720
    %v1201 = vpack.c.b16 %v725, %v721
    %v1202 = vpack.c.b16 %v726, %v722
    %v1203 = vpack.c.b16 %v727, %v723
    %v1204 = vpack.c.b16 %v732, %v728
    %v1205 = vpack.c.b16 %v733, %v729
    %v1206 = vpack.c.b16 %v734, %v730
    %v1207 = vpack.c.b16 %v735, %v731
    %v1208 = vpack.c.b16 %v740, %v736
    %v1209 = vpack.c.b16 %v741, %v737
    %v1210 = vpack.c.b16 %v742, %v738
    %v1211 = vpack.c.b16 %v743, %v739
    %v1212 = vpack.c.b16 %v748, %v744
    %v1213 = vpack.c.b16 %v749, %v745
    %v1214 = vpack.c.b16 %v750, %v746
    %v1215 = vpack.c.b16 %v751, %v747
    %v1216 = vpack.c.b16 %v756, %v752
    %v1217 = vpack.c.b16 %v757, %v753
    %v1218 = vpack.c.b16 %v758, %v754
    %v1219 = vpack.c.b16 %v759, %v755
    %v1220 = vpack.c.b16 %v764, %v760
    %v1221 = vpack.c.b16 %v765, %v761
    %v1222 = vpack.c.b16 %v766, %v762
    %v1223 = vpack.c.b16 %v767, %v763
    %v1224 = vpack.c.b16 %v772, %v768
    %v1225 = vpack.c.b16 %v773, %v769
    %v1226 = vpack.c.b16 %v774, %v770
    %v1227 = vpack.c.b16 %v775, %v771
    %v1228 = vpack.c.b16 %v780, %v776
    %v1229 = vpack.c.b16 %v781, %v777
    %v1230 = vpack.c.b16 %v782, %v778
    %v1231 = vpack.c.b16 %v783, %v779
    %v1232 = vpack.c.b16 %v788, %v784
    %v1233 = vpack.c.b16 %v789, %v785
    %v1234 = vpack.c.b16 %v790, %v786
    %v1235 = vpack.c.b16 %v791, %v787
    %v1236 = vpack.c.b16 %v796, %v792
    %v1237 = vpack.c.b16 %v797, %v793
    %v1238 = vpack.c.b16 %v798, %v794
    %v1239 = vpack.c.b16 %v799, %v795
    %v1240 = vpack.c.b16 %v804, %v800
    %v1241 = vpack.c.b16 %v805, %v801
    %v1242 = vpack.c.b16 %v806, %v802
    %v1243 = vpack.c.b16 %v807, %v803
    %v1244 = vpack.c.b16 %v812, %v808
    %v1245 = vpack.c.b16 %v813, %v809
    %v1246 = vpack.c.b16 %v814, %v810
    %v1247 = vpack.c.b16 %v815, %v811
    %v1248 = vpack.c.b16 %v820, %v816
    %v1249 = vpack.c.b16 %v821, %v817
    %v1250 = vpack.c.b16 %v822, %v818
    %v1251 = vpack.c.b16 %v823, %v819
    %v1252 = vpack.c.b16 %v828, %v824
    %v1253 = vpack.c.b16 %v829, %v825
    %v1254 = vpack.c.b16 %v830, %v826
    %v1255 = vpack.c.b16 %v831, %v827
    %v1256 = vpack.c.b16 %v836, %v832
    %v1257 = vpack.c.b16 %v837, %v833
    %v1258 = vpack.c.b16 %v838, %v834
    %v1259 = vpack.c.b16 %v839, %v835
    %v1260 = vpack.c.b16 %v844, %v840
    %v1261 = vpack.c.b16 %v845, %v841
    %v1262 = vpack.c.b16 %v846, %v842
    %v1263 = vpack.c.b16 %v847, %v843
    %v1264 = vpack.c.b16 %v852, %v848
    %v1265 = vpack.c.b16 %v853, %v849
    %v1266 = vpack.c.b16 %v854, %v850
    %v1267 = vpack.c.b16 %v855, %v851
    %v1268 = vpack.c.b16 %v860, %v856
    %v1269 = vpack.c.b16 %v861, %v857
    %v1270 = vpack.c.b16 %v862, %v858
    %v1271 = vpack.c.b16 %v863, %v859
    %v1272 = vpack.c.b16 %v868, %v864
    %v1273 = vpack.c.b16 %v869, %v865
    %v1274 = vpack.c.b16 %v870, %v866
    %v1275 = vpack.c.b16 %v871, %v867
    %v1276 = vpack.c.b16 %v876, %v872
    %v1277 = vpack.c.b16 %v877, %v873
    %v1278 = vpack.c.b16 %v878, %v874
    %v1279 = vpack.c.b16 %v879, %v875
    %v1280 = vpack.c.b16 %v884, %v880
    %v1281 = vpack.c.b16 %v885, %v881
    %v1282 = vpack.c.b16 %v886, %v882
    %v1283 = vpack.c.b16 %v887, %v883
    %v1284 = vpack.c.b16 %v892, %v888
    %v1285 = vpack.c.b16 %v893, %v889
    %v1286 = vpack.c.b16 %v894, %v890
    %v1287 = vpack.c.b16 %v895, %v891
    %v1288 = vpack.c.b16 %v900, %v896
    %v1289 = vpack.c.b16 %v901, %v897
    %v1290 = vpack.c.b16 %v902, %v898
    %v1291 = vpack.c.b16 %v903, %v899
    %v1292 = vpack.c.b16 %v908, %v904
    %v1293 = vpack.c.b16 %v909, %v905
    %v1294 = vpack.c.b16 %v910, %v906
    %v1295 = vpack.c.b16 %v911, %v907
    %v1296 = vpack.c.b16 %v916, %v912
    %v1297 = vpack.c.b16 %v917, %v913
    %v1298 = vpack.c.b16 %v918, %v914
    %v1299 = vpack.c.b16 %v919, %v915
    %v1300 = vpack.c.b16 %v924, %v920
    %v1301 = vpack.c.b16 %v925, %v921
    %v1302 = vpack.c.b16 %v926, %v922
    %v1303 = vpack.c.b16 %v927, %v923
    %v1304 = vpack.c.b16 %v932, %v928
    %v1305 = vpack.c.b16 %v933, %v929
    %v1306 = vpack.c.b16 %v934, %v930
    %v1307 = vpack.c.b16 %v935, %v931
    %v1308 = vpack.c.b16 %v940, %v936
    %v1309 = vpack.c.b16 %v941, %v937
    %v1310 = vpack.c.b16 %v942, %v938
    %v1311 = vpack.c.b16 %v943, %v939
    %v1312 = vpack.c.b16 %v948, %v944
    %v1313 = vpack.c.b16 %v949, %v945
    %v1314 = vpack.c.b16 %v950, %v946
    %v1315 = vpack.c.b16 %v951, %v947
    %v1316 = vpack.c.b16 %v956, %v952
    %v1317 = vpack.c.b16 %v957, %v953
    %v1318 = vpack.c.b16 %v958, %v954
    %v1319 = vpack.c.b16 %v959, %v955
    %v1320 = vpack.c.b16 %v964, %v960
    %v1321 = vpack.c.b16 %v965, %v961
    %v1322 = vpack.c.b16 %v966, %v962
    %v1323 = vpack.c.b16 %v967, %v963
    %v1324 = vpack.c.b16 %v972, %v968
    %v1325 = vpack.c.b16 %v973, %v969
    %v1326 = vpack.c.b16 %v974, %v970
    %v1327 = vpack.c.b16 %v975, %v971
    %v1328 = vpack.c.b16 %v980, %v976
    %v1329 = vpack.c.b16 %v981, %v977
    %v1330 = vpack.c.b16 %v982, %v978
    %v1331 = vpack.c.b16 %v983, %v979
    %v1332 = vpack.c.b16 %v988, %v984
    %v1333 = vpack.c.b16 %v989, %v985
    %v1334 = vpack.c.b16 %v990, %v986
    %v1335 = vpack.c.b16 %v991, %v987
    %v1336 = vpack.c.b16 %v996, %v992
    %v1337 = vpack.c.b16 %v997, %v993
    %v1338 = vpack.c.b16 %v998, %v994
    %v1339 = vpack.c.b16 %v999, %v995
    %v1340 = vpack.c.b16 %v1004, %v1000
    %v1341 = vpack.c.b16 %v1005, %v1001
    %v1342 = vpack.c.b16 %v1006, %v1002
    %v1343 = vpack.c.b16 %v1007, %v1003
    %v1344 = vpack.c.b16 %v1012, %v1008
    %v1345 = vpack.c.b16 %v1013, %v1009
    %v1346 = vpack.c.b16 %v1014, %v1010
    %v1347 = vpack.c.b16 %v1015, %v1011
    %v1348 = vpack.c.b16 %v1020, %v1016
    %v1349 = vpack.c.b16 %v1021, %v1017
    %v1350 = vpack.c.b16 %v1022, %v1018
    %v1351 = vpack.c.b16 %v1023, %v1019
    %v1352 = vpack.c.b16 %v1028, %v1024
    %v1353 = vpack.c.b16 %v1029, %v1025
    %v1354 = vpack.c.b16 %v1030, %v1026
    %v1355 = vpack.c.b16 %v1031, %v1027
    %v1356 = vpack.c.b16 %v1036, %v1032
    %v1357 = vpack.c.b16 %v1037, %v1033
    %v1358 = vpack.c.b16 %v1038, %v1034
    %v1359 = vpack.c.b16 %v1039, %v1035
    %v1360 = vpack.c.b16 %v1044, %v1040
    %v1361 = vpack.c.b16 %v1045, %v1041
    %v1362 = vpack.c.b16 %v1046, %v1042
    %v1363 = vpack.c.b16 %v1047, %v1043
    %v1364 = vpack.c.b16 %v1052, %v1048
    %v1365 = vpack.c.b16 %v1053, %v1049
    %v1366 = vpack.c.b16 %v1054, %v1050
    %v1367 = vpack.c.b16 %v1055, %v1051
    %v1368 = vpack.c.b16 %v1060, %v1056
    %v1369 = vpack.c.b16 %v1061, %v1057
    %v1370 = vpack.c.b16 %v1062, %v1058
    %v1371 = vpack.c.b16 %v1063, %v1059
    %v1372 = vpack.c.b16 %v1068, %v1064
    %v1373 = vpack.c.b16 %v1069, %v1065
    %v1374 = vpack.c.b16 %v1070, %v1066
    %v1375 = vpack.c.b16 %v1071, %v1067
    %v1376 = vpack.c.b16 %v1076, %v1072
    %v1377 = vpack.c.b16 %v1077, %v1073
    %v1378 = vpack.c.b16 %v1078, %v1074
    %v1379 = vpack.c.b16 %v1079, %v1075
    %v1380 = vpack.c.b16 %v1084, %v1080
    %v1381 = vpack.c.b16 %v1085, %v1081
    %v1382 = vpack.c.b16 %v1086, %v1082
    %v1383 = vpack.c.b16 %v1087, %v1083
    %v1384 = vpack.c.b16 %v1092, %v1088
    %v1385 = vpack.c.b16 %v1093, %v1089
    %v1386 = vpack.c.b16 %v1094, %v1090
    %v1387 = vpack.c.b16 %v1095, %v1091
    %v1388 = vpack.c.b16 %v1100, %v1096
    %v1389 = vpack.c.b16 %v1101, %v1097
    %v1390 = vpack.c.b16 %v1102, %v1098
    %v1391 = vpack.c.b16 %v1103, %v1099
    %v1392 = vpack.c.b16 %v1108, %v1104
    %v1393 = vpack.c.b16 %v1109, %v1105
    %v1394 = vpack.c.b16 %v1110, %v1106
    %v1395 = vpack.c.b16 %v1111, %v1107
    %v1396 = vpack.c.b16 %v1116, %v1112
    %v1397 = vpack.c.b16 %v1117, %v1113
    %v1398 = vpack.c.b16 %v1118, %v1114
    %v1399 = vpack.c.b16 %v1119, %v1115
    %v1400 = vpack.c.b16 %v1124, %v1120
    %v1401 = vpack.c.b16 %v1125, %v1121
    %v1402 = vpack.c.b16 %v1126, %v1122
    %v1403 = vpack.c.b16 %v1127, %v1123
    %v1404 = vpack.c.b16 %v1132, %v1128
    %v1405 = vpack.c.b16 %v1133, %v1129
    %v1406 = vpack.c.b16 %v1134, %v1130
    %v1407 = vpack.c.b16 %v1135, %v1131
    %v1408 = vpack.c.b16 %v1140, %v1136
    %v1409 = vpack.c.b16 %v1141, %v1137
    %v1410 = vpack.c.b16 %v1142, %v1138
    %v1411 = vpack.c.b16 %v1143, %v1139
    %v1412 = vpack.c.b16 %v1148, %v1144
    %v1413 = vpack.c.b16 %v1149, %v1145
    %v1414 = vpack.c.b16 %v1150, %v1146
    %v1415 = vpack.c.b16 %v1151, %v1147
    %v1416 = vpack.c.b16 %v1156, %v1152
    %v1417 = vpack.c.b16 %v1157, %v1153
    %v1418 = vpack.c.b16 %v1158, %v1154
    %v1419 = vpack.c.b16 %v1159, %v1155
    %v1420 = vpack.c.b16 %v1164, %v1160
    %v1421 = vpack.c.b16 %v1165, %v1161
    %v1422 = vpack.c.b16 %v1166, %v1162
    %v1423 = vpack.c.b16 %v1167, %v1163
    %1680 = vmatprep.subr.bf16.mxu0 %v1169
    %1681 = vmatpush1.bf16.msra.mxu0 %v1168
    %1682 = vmatprep.subr.bf16.mxu0 %v1173
    %1683 = vmatpush1.bf16.msra.mxu0 %v1172
    %1684 = vmatprep.subr.bf16.mxu0 %v1177
    %1685 = vmatpush1.bf16.msra.mxu0 %v1176
    %1686 = vmatprep.subr.bf16.mxu0 %v1181
    %1687 = vmatpush1.bf16.msra.mxu0 %v1180
    %1688 = vmatprep.subr.bf16.mxu0 %v1185
    %1689 = vmatpush1.bf16.msra.mxu0 %v1184
    %1690 = vmatprep.subr.bf16.mxu0 %v1189
    %1691 = vmatpush1.bf16.msra.mxu0 %v1188
    %1692 = vmatprep.subr.bf16.mxu0 %v1193
    %1693 = vmatpush1.bf16.msra.mxu0 %v1192
    %1694 = vmatprep.subr.bf16.mxu0 %v1197
    %1695 = vmatpush1.bf16.msra.mxu0 %v1196
    %1696 = vmatprep.subr.bf16.mxu0 %v1201
    %1697 = vmatpush1.bf16.msra.mxu0 %v1200
    %1698 = vmatprep.subr.bf16.mxu0 %v1205
    %1699 = vmatpush1.bf16.msra.mxu0 %v1204
    %1700 = vmatprep.subr.bf16.mxu0 %v1209
    %1701 = vmatpush1.bf16.msra.mxu0 %v1208
    %1702 = vmatprep.subr.bf16.mxu0 %v1213
    %1703 = vmatpush1.bf16.msra.mxu0 %v1212
    %1704 = vmatprep.subr.bf16.mxu0 %v1217
    %1705 = vmatpush1.bf16.msra.mxu0 %v1216
    %1706 = vmatprep.subr.bf16.mxu0 %v1221
    %1707 = vmatpush1.bf16.msra.mxu0 %v1220
    %1708 = vmatprep.subr.bf16.mxu0 %v1225
    %1709 = vmatpush1.bf16.msra.mxu0 %v1224
    %1710 = vmatprep.subr.bf16.mxu0 %v1229
    %1711 = vmatpush1.bf16.msra.mxu0 %v1228
    %1712 = vmatprep.mubr.bf16.mxu0 %v137
    %1713 = vmatmul.mubr.bf16.gmra.mrb[0].mxu0 %v136
    %v1714 = vpop.f32.mrb[0].mxu0
    %v1715 = vadd.f32 0.0, %v1714
    %v1716 = vpop.f32.mrb[0].mxu0
    %v1717 = vadd.f32 0.0, %v1716
    %v1718 = vpop.f32.mrb[0].mxu0
    %v1719 = vpop.f32.mrb[0].mxu0
    %1720 = vdwg.mxu0
    %1721 = vmatprep.subr.bf16.mxu0 %v1233
    %1722 = vmatpush1.bf16.msra.mxu0 %v1232
    %1723 = vmatprep.subr.bf16.mxu0 %v1237
    %1724 = vmatpush1.bf16.msra.mxu0 %v1236
    %1725 = vmatprep.subr.bf16.mxu0 %v1241
    %1726 = vmatpush1.bf16.msra.mxu0 %v1240
    %1727 = vmatprep.subr.bf16.mxu0 %v1245
    %1728 = vmatpush1.bf16.msra.mxu0 %v1244
    %1729 = vmatprep.subr.bf16.mxu0 %v1249
    %1730 = vmatpush1.bf16.msra.mxu0 %v1248
    %1731 = vmatprep.subr.bf16.mxu0 %v1253
    %1732 = vmatpush1.bf16.msra.mxu0 %v1252
    %1733 = vmatprep.subr.bf16.mxu0 %v1257
    %1734 = vmatpush1.bf16.msra.mxu0 %v1256
    %1735 = vmatprep.subr.bf16.mxu0 %v1261
    %1736 = vmatpush1.bf16.msra.mxu0 %v1260
    %1737 = vmatprep.subr.bf16.mxu0 %v1265
    %1738 = vmatpush1.bf16.msra.mxu0 %v1264
    %1739 = vmatprep.subr.bf16.mxu0 %v1269
    %1740 = vmatpush1.bf16.msra.mxu0 %v1268
    %1741 = vmatprep.subr.bf16.mxu0 %v1273
    %1742 = vmatpush1.bf16.msra.mxu0 %v1272
    %1743 = vmatprep.subr.bf16.mxu0 %v1277
    %1744 = vmatpush1.bf16.msra.mxu0 %v1276
    %1745 = vmatprep.subr.bf16.mxu0 %v1281
    %1746 = vmatpush1.bf16.msra.mxu0 %v1280
    %1747 = vmatprep.subr.bf16.mxu0 %v1285
    %1748 = vmatpush1.bf16.msra.mxu0 %v1284
    %1749 = vmatprep.subr.bf16.mxu0 %v1289
    %1750 = vmatpush1.bf16.msra.mxu0 %v1288
    %1751 = vmatprep.subr.bf16.mxu0 %v1293
    %1752 = vmatpush1.bf16.msra.mxu0 %v1292
    %1753 = vmatprep.mubr.bf16.mxu0 %v139
    %1754 = vmatmul.mubr.bf16.gmra.mrb[0].mxu0 %v138
    %v1755 = vpop.f32.mrb[0].mxu0
    %v1756 = vadd.f32 %v1715, %v1755
    %v1757 = vpop.f32.mrb[0].mxu0
    %v1758 = vadd.f32 %v1717, %v1757
    %v1759 = vpop.f32.mrb[0].mxu0
    %v1760 = vpop.f32.mrb[0].mxu0
    %1761 = vdwg.mxu0
    %1762 = vmatprep.subr.bf16.mxu0 %v1297
    %1763 = vmatpush1.bf16.msra.mxu0 %v1296
    %1764 = vmatprep.subr.bf16.mxu0 %v1301
    %1765 = vmatpush1.bf16.msra.mxu0 %v1300
    %1766 = vmatprep.subr.bf16.mxu0 %v1305
    %1767 = vmatpush1.bf16.msra.mxu0 %v1304
    %1768 = vmatprep.subr.bf16.mxu0 %v1309
    %1769 = vmatpush1.bf16.msra.mxu0 %v1308
    %1770 = vmatprep.subr.bf16.mxu0 %v1313
    %1771 = vmatpush1.bf16.msra.mxu0 %v1312
    %1772 = vmatprep.subr.bf16.mxu0 %v1317
    %1773 = vmatpush1.bf16.msra.mxu0 %v1316
    %1774 = vmatprep.subr.bf16.mxu0 %v1321
    %1775 = vmatpush1.bf16.msra.mxu0 %v1320
    %1776 = vmatprep.subr.bf16.mxu0 %v1325
    %1777 = vmatpush1.bf16.msra.mxu0 %v1324
    %1778 = vmatprep.subr.bf16.mxu0 %v1329
    %1779 = vmatpush1.bf16.msra.mxu0 %v1328
    %1780 = vmatprep.subr.bf16.mxu0 %v1333
    %1781 = vmatpush1.bf16.msra.mxu0 %v1332
    %1782 = vmatprep.subr.bf16.mxu0 %v1337
    %1783 = vmatpush1.bf16.msra.mxu0 %v1336
    %1784 = vmatprep.subr.bf16.mxu0 %v1341
    %1785 = vmatpush1.bf16.msra.mxu0 %v1340
    %1786 = vmatprep.subr.bf16.mxu0 %v1345
    %1787 = vmatpush1.bf16.msra.mxu0 %v1344
    %1788 = vmatprep.subr.bf16.mxu0 %v1349
    %1789 = vmatpush1.bf16.msra.mxu0 %v1348
    %1790 = vmatprep.subr.bf16.mxu0 %v1353
    %1791 = vmatpush1.bf16.msra.mxu0 %v1352
    %1792 = vmatprep.subr.bf16.mxu0 %v1357
    %1793 = vmatpush1.bf16.msra.mxu0 %v1356
    %1794 = vmatprep.mubr.bf16.mxu0 %v141
    %1795 = vmatmul.mubr.bf16.gmra.mrb[0].mxu0 %v140
    %v1796 = vpop.f32.mrb[0].mxu0
    %v1797 = vadd.f32 %v1756, %v1796
    %v1798 = vpop.f32.mrb[0].mxu0
    %v1799 = vadd.f32 %v1758, %v1798
    %v1800 = vpop.f32.mrb[0].mxu0
    %v1801 = vpop.f32.mrb[0].mxu0
    %1802 = vdwg.mxu0
    %1803 = vmatprep.subr.bf16.mxu0 %v1361
    %1804 = vmatpush1.bf16.msra.mxu0 %v1360
    %1805 = vmatprep.subr.bf16.mxu0 %v1365
    %1806 = vmatpush1.bf16.msra.mxu0 %v1364
    %1807 = vmatprep.subr.bf16.mxu0 %v1369
    %1808 = vmatpush1.bf16.msra.mxu0 %v1368
    %1809 = vmatprep.subr.bf16.mxu0 %v1373
    %1810 = vmatpush1.bf16.msra.mxu0 %v1372
    %1811 = vmatprep.subr.bf16.mxu0 %v1377
    %1812 = vmatpush1.bf16.msra.mxu0 %v1376
    %1813 = vmatprep.subr.bf16.mxu0 %v1381
    %1814 = vmatpush1.bf16.msra.mxu0 %v1380
    %1815 = vmatprep.subr.bf16.mxu0 %v1385
    %1816 = vmatpush1.bf16.msra.mxu0 %v1384
    %1817 = vmatprep.subr.bf16.mxu0 %v1389
    %1818 = vmatpush1.bf16.msra.mxu0 %v1388
    %1819 = vmatprep.subr.bf16.mxu0 %v1393
    %1820 = vmatpush1.bf16.msra.mxu0 %v1392
    %1821 = vmatprep.subr.bf16.mxu0 %v1397
    %1822 = vmatpush1.bf16.msra.mxu0 %v1396
    %1823 = vmatprep.subr.bf16.mxu0 %v1401
    %1824 = vmatpush1.bf16.msra.mxu0 %v1400
    %1825 = vmatprep.subr.bf16.mxu0 %v1405
    %1826 = vmatpush1.bf16.msra.mxu0 %v1404
    %1827 = vmatprep.subr.bf16.mxu0 %v1409
    %1828 = vmatpush1.bf16.msra.mxu0 %v1408
    %1829 = vmatprep.subr.bf16.mxu0 %v1413
    %1830 = vmatpush1.bf16.msra.mxu0 %v1412
    %1831 = vmatprep.subr.bf16.mxu0 %v1417
    %1832 = vmatpush1.bf16.msra.mxu0 %v1416
    %1833 = vmatprep.subr.bf16.mxu0 %v1421
    %1834 = vmatpush1.bf16.msra.mxu0 %v1420
    %1835 = vmatprep.mubr.bf16.mxu0 %v143
    %1836 = vmatmul.mubr.bf16.gmra.mrb[0].mxu0 %v142
    %v1837 = vpop.f32.mrb[0].mxu0
    %v1838 = vadd.f32 %v1797, %v1837
    %v1839 = vpop.f32.mrb[0].mxu0
    %v1840 = vadd.f32 %v1799, %v1839
    %v1841 = vpop.f32.mrb[0].mxu0
    %v1842 = vpop.f32.mrb[0].mxu0
    %1843 = vdwg.mxu0
    %1844 = vmatprep.subr.bf16.mxu0 %v1171
    %1845 = vmatpush1.bf16.msra.mxu0 %v1170
    %1846 = vmatprep.subr.bf16.mxu0 %v1175
    %1847 = vmatpush1.bf16.msra.mxu0 %v1174
    %1848 = vmatprep.subr.bf16.mxu0 %v1179
    %1849 = vmatpush1.bf16.msra.mxu0 %v1178
    %1850 = vmatprep.subr.bf16.mxu0 %v1183
    %1851 = vmatpush1.bf16.msra.mxu0 %v1182
    %1852 = vmatprep.subr.bf16.mxu0 %v1187
    %1853 = vmatpush1.bf16.msra.mxu0 %v1186
    %1854 = vmatprep.subr.bf16.mxu0 %v1191
    %1855 = vmatpush1.bf16.msra.mxu0 %v1190
    %1856 = vmatprep.subr.bf16.mxu0 %v1195
    %1857 = vmatpush1.bf16.msra.mxu0 %v1194
    %1858 = vmatprep.subr.bf16.mxu0 %v1199
    %1859 = vmatpush1.bf16.msra.mxu0 %v1198
    %1860 = vmatprep.subr.bf16.mxu0 %v1203
    %1861 = vmatpush1.bf16.msra.mxu0 %v1202
    %1862 = vmatprep.subr.bf16.mxu0 %v1207
    %1863 = vmatpush1.bf16.msra.mxu0 %v1206
    %1864 = vmatprep.subr.bf16.mxu0 %v1211
    %1865 = vmatpush1.bf16.msra.mxu0 %v1210
    %1866 = vmatprep.subr.bf16.mxu0 %v1215
    %1867 = vmatpush1.bf16.msra.mxu0 %v1214
    %1868 = vmatprep.subr.bf16.mxu0 %v1219
    %1869 = vmatpush1.bf16.msra.mxu0 %v1218
    %1870 = vmatprep.subr.bf16.mxu0 %v1223
    %1871 = vmatpush1.bf16.msra.mxu0 %v1222
    %1872 = vmatprep.subr.bf16.mxu0 %v1227
    %1873 = vmatpush1.bf16.msra.mxu0 %v1226
    %1874 = vmatprep.subr.bf16.mxu0 %v1231
    %1875 = vmatpush1.bf16.msra.mxu0 %v1230
    %1876 = vmatprep.mubr.bf16.mxu0 %v137
    %1877 = vmatmul.mubr.bf16.gmra.mrb[0].mxu0 %v136
    %v1878 = vpop.f32.mrb[0].mxu0
    %v1879 = vadd.f32 0.0, %v1878
    %v1880 = vpop.f32.mrb[0].mxu0
    %v1881 = vadd.f32 0.0, %v1880
    %v1882 = vpop.f32.mrb[0].mxu0
    %v1883 = vpop.f32.mrb[0].mxu0
    %1884 = vdwg.mxu0
    %1885 = vmatprep.subr.bf16.mxu0 %v1235
    %1886 = vmatpush1.bf16.msra.mxu0 %v1234
    %1887 = vmatprep.subr.bf16.mxu0 %v1239
    %1888 = vmatpush1.bf16.msra.mxu0 %v1238
    %1889 = vmatprep.subr.bf16.mxu0 %v1243
    %1890 = vmatpush1.bf16.msra.mxu0 %v1242
    %1891 = vmatprep.subr.bf16.mxu0 %v1247
    %1892 = vmatpush1.bf16.msra.mxu0 %v1246
    %1893 = vmatprep.subr.bf16.mxu0 %v1251
    %1894 = vmatpush1.bf16.msra.mxu0 %v1250
    %1895 = vmatprep.subr.bf16.mxu0 %v1255
    %1896 = vmatpush1.bf16.msra.mxu0 %v1254
    %1897 = vmatprep.subr.bf16.mxu0 %v1259
    %1898 = vmatpush1.bf16.msra.mxu0 %v1258
    %1899 = vmatprep.subr.bf16.mxu0 %v1263
    %1900 = vmatpush1.bf16.msra.mxu0 %v1262
    %1901 = vmatprep.subr.bf16.mxu0 %v1267
    %1902 = vmatpush1.bf16.msra.mxu0 %v1266
    %1903 = vmatprep.subr.bf16.mxu0 %v1271
    %1904 = vmatpush1.bf16.msra.mxu0 %v1270
    %1905 = vmatprep.subr.bf16.mxu0 %v1275
    %1906 = vmatpush1.bf16.msra.mxu0 %v1274
    %1907 = vmatprep.subr.bf16.mxu0 %v1279
    %1908 = vmatpush1.bf16.msra.mxu0 %v1278
    %1909 = vmatprep.subr.bf16.mxu0 %v1283
    %1910 = vmatpush1.bf16.msra.mxu0 %v1282
    %1911 = vmatprep.subr.bf16.mxu0 %v1287
    %1912 = vmatpush1.bf16.msra.mxu0 %v1286
    %1913 = vmatprep.subr.bf16.mxu0 %v1291
    %1914 = vmatpush1.bf16.msra.mxu0 %v1290
    %1915 = vmatprep.subr.bf16.mxu0 %v1295
    %1916 = vmatpush1.bf16.msra.mxu0 %v1294
    %1917 = vmatprep.mubr.bf16.mxu0 %v139
    %1918 = vmatmul.mubr.bf16.gmra.mrb[0].mxu0 %v138
    %v1919 = vpop.f32.mrb[0].mxu0
    %v1920 = vadd.f32 %v1879, %v1919
    %v1921 = vpop.f32.mrb[0].mxu0
    %v1922 = vadd.f32 %v1881, %v1921
    %v1923 = vpop.f32.mrb[0].mxu0
    %v1924 = vpop.f32.mrb[0].mxu0
    %1925 = vdwg.mxu0
    %1926 = vmatprep.subr.bf16.mxu0 %v1299
    %1927 = vmatpush1.bf16.msra.mxu0 %v1298
    %1928 = vmatprep.subr.bf16.mxu0 %v1303
    %1929 = vmatpush1.bf16.msra.mxu0 %v1302
    %1930 = vmatprep.subr.bf16.mxu0 %v1307
    %1931 = vmatpush1.bf16.msra.mxu0 %v1306
    %1932 = vmatprep.subr.bf16.mxu0 %v1311
    %1933 = vmatpush1.bf16.msra.mxu0 %v1310
    %1934 = vmatprep.subr.bf16.mxu0 %v1315
    %1935 = vmatpush1.bf16.msra.mxu0 %v1314
    %1936 = vmatprep.subr.bf16.mxu0 %v1319
    %1937 = vmatpush1.bf16.msra.mxu0 %v1318
    %1938 = vmatprep.subr.bf16.mxu0 %v1323
    %1939 = vmatpush1.bf16.msra.mxu0 %v1322
    %1940 = vmatprep.subr.bf16.mxu0 %v1327
    %1941 = vmatpush1.bf16.msra.mxu0 %v1326
    %1942 = vmatprep.subr.bf16.mxu0 %v1331
    %1943 = vmatpush1.bf16.msra.mxu0 %v1330
    %1944 = vmatprep.subr.bf16.mxu0 %v1335
    %1945 = vmatpush1.bf16.msra.mxu0 %v1334
    %1946 = vmatprep.subr.bf16.mxu0 %v1339
    %1947 = vmatpush1.bf16.msra.mxu0 %v1338
    %1948 = vmatprep.subr.bf16.mxu0 %v1343
    %1949 = vmatpush1.bf16.msra.mxu0 %v1342
    %1950 = vmatprep.subr.bf16.mxu0 %v1347
    %1951 = vmatpush1.bf16.msra.mxu0 %v1346
    %1952 = vmatprep.subr.bf16.mxu0 %v1351
    %1953 = vmatpush1.bf16.msra.mxu0 %v1350
    %1954 = vmatprep.subr.bf16.mxu0 %v1355
    %1955 = vmatpush1.bf16.msra.mxu0 %v1354
    %1956 = vmatprep.subr.bf16.mxu0 %v1359
    %1957 = vmatpush1.bf16.msra.mxu0 %v1358
    %1958 = vmatprep.mubr.bf16.mxu0 %v141
    %1959 = vmatmul.mubr.bf16.gmra.mrb[0].mxu0 %v140
    %v1960 = vpop.f32.mrb[0].mxu0
    %v1961 = vadd.f32 %v1920, %v1960
    %v1962 = vpop.f32.mrb[0].mxu0
    %v1963 = vadd.f32 %v1922, %v1962
    %v1964 = vpop.f32.mrb[0].mxu0
    %v1965 = vpop.f32.mrb[0].mxu0
    %1966 = vdwg.mxu0
    %1967 = vmatprep.subr.bf16.mxu0 %v1363
    %1968 = vmatpush1.bf16.msra.mxu0 %v1362
    %1969 = vmatprep.subr.bf16.mxu0 %v1367
    %1970 = vmatpush1.bf16.msra.mxu0 %v1366
    %1971 = vmatprep.subr.bf16.mxu0 %v1371
    %1972 = vmatpush1.bf16.msra.mxu0 %v1370
    %1973 = vmatprep.subr.bf16.mxu0 %v1375
    %1974 = vmatpush1.bf16.msra.mxu0 %v1374
    %1975 = vmatprep.subr.bf16.mxu0 %v1379
    %1976 = vmatpush1.bf16.msra.mxu0 %v1378
    %1977 = vmatprep.subr.bf16.mxu0 %v1383
    %1978 = vmatpush1.bf16.msra.mxu0 %v1382
    %1979 = vmatprep.subr.bf16.mxu0 %v1387
    %1980 = vmatpush1.bf16.msra.mxu0 %v1386
    %1981 = vmatprep.subr.bf16.mxu0 %v1391
    %1982 = vmatpush1.bf16.msra.mxu0 %v1390
    %1983 = vmatprep.subr.bf16.mxu0 %v1395
    %1984 = vmatpush1.bf16.msra.mxu0 %v1394
    %1985 = vmatprep.subr.bf16.mxu0 %v1399
    %1986 = vmatpush1.bf16.msra.mxu0 %v1398
    %1987 = vmatprep.subr.bf16.mxu0 %v1403
    %1988 = vmatpush1.bf16.msra.mxu0 %v1402
    %1989 = vmatprep.subr.bf16.mxu0 %v1407
    %1990 = vmatpush1.bf16.msra.mxu0 %v1406
    %1991 = vmatprep.subr.bf16.mxu0 %v1411
    %1992 = vmatpush1.bf16.msra.mxu0 %v1410
    %1993 = vmatprep.subr.bf16.mxu0 %v1415
    %1994 = vmatpush1.bf16.msra.mxu0 %v1414
    %1995 = vmatprep.subr.bf16.mxu0 %v1419
    %1996 = vmatpush1.bf16.msra.mxu0 %v1418
    %1997 = vmatprep.subr.bf16.mxu0 %v1423
    %1998 = vmatpush1.bf16.msra.mxu0 %v1422
    %1999 = vmatprep.mubr.bf16.mxu0 %v143
    %2000 = vmatmul.mubr.bf16.gmra.mrb[0].mxu0 %v142
    %v2001 = vpop.f32.mrb[0].mxu0
    %v2002 = vadd.f32 %v1961, %v2001
    %v2003 = vpop.f32.mrb[0].mxu0
    %v2004 = vadd.f32 %v1963, %v2003
    %v2005 = vpop.f32.mrb[0].mxu0
    %v2006 = vpop.f32.mrb[0].mxu0
    %2007 = vdwg.mxu0
    %v2008 = vadd.f32 %v36, %v1838
    %v2009 = vadd.f32 %v37, %v1840
    %v2010 = vadd.f32 %v38, %v2002
    %v2011 = vadd.f32 %v39, %v2004
    %2012 = vst [vmem:[#allocation2] sm:$0xff] %v2008
    %2013 = vst [vmem:[#allocation2 + $0x8] sm:$0xff] %v2009
    %2014 = vst [vmem:[#allocation2 + $0x10] sm:$0xff] %v2010
    %2015 = vst [vmem:[#allocation2 + $0x18] sm:$0xff] %v2011
    // Predicated region
    $region34: #{discriminator_forward.1} parent=1 // pred_check
      %p2016 = pneg %p28
    $region35: #{discriminator_forward.1} parent=1 // pred_check_branch
      %2018 = sbr.rel (%p2016) target = $region37
    $region36: #{discriminator_forward.1} parent=1 // pred_region
      %v2019 = vld [vmem:[#allocation2] sm:$0xff]
      %v2020 = vld [vmem:[#allocation2 + $0x8] sm:$0xff]
      %v2021 = vld [vmem:[#allocation2 + $0x10] sm:$0xff]
      %v2022 = vld [vmem:[#allocation2 + $0x18] sm:$0xff]
      %v2023 = vld [vmem:[%s2] sm:$0xf]
      %v2025 = vlaneseq
      %v2026 = vshrl.u32 %v2025, 7
      %v2027 = vsub.s32 0, %v2026
      %v2028 = vrot.slane %v2023, %v2027
      %v2029 = vlaneseq
      %v2030 = vshrl.u32 %v2029, 7
      %v2031 = vsub.s32 1, %v2030
      %v2032 = vrot.slane %v2023, %v2031
      %v2033 = vlaneseq
      %v2034 = vshrl.u32 %v2033, 7
      %v2035 = vsub.s32 2, %v2034
      %v2036 = vrot.slane %v2023, %v2035
      %v2037 = vlaneseq
      %v2038 = vshrl.u32 %v2037, 7
      %v2039 = vsub.s32 3, %v2038
      %v2040 = vrot.slane %v2023, %v2039
      %v2045 = vadd.f32 %v2019, %v2028
      %v2046 = vadd.f32 %v2020, %v2032
      %v2047 = vadd.f32 %v2021, %v2036
      %v2048 = vadd.f32 %v2022, %v2040
      %v2049 = vmul.f32 %v2045, 0.2
      %v2050 = vmul.f32 %v2046, 0.2
      %v2051 = vmul.f32 %v2047, 0.2
      %v2052 = vmul.f32 %v2048, 0.2
      %v2053 = vmax.f32 %v2045, %v2049
      %v2054 = vmax.f32 %v2046, %v2050
      %v2055 = vmax.f32 %v2047, %v2051
      %v2056 = vmax.f32 %v2048, %v2052
      %v2057 = vpack.c.bf16 %v2053, %v2053
      %v2058 = vpack.c.bf16 %v2054, %v2054
      %v2059 = vpack.c.bf16 %v2055, %v2055
      %v2060 = vpack.c.bf16 %v2056, %v2056
      %v2061 = vld [vmem:[%s3] sm:$0xff]
      %v2062 = vld [vmem:[%s3 + $0x8] sm:$0xff]
      %v2063 = vld [vmem:[%s3 + $0x10] sm:$0xff]
      %v2064 = vld [vmem:[%s3 + $0x18] sm:$0xff]
      %v2065 = vld [vmem:[%s3 + $0x20] sm:$0xff]
      %v2066 = vld [vmem:[%s3 + $0x28] sm:$0xff]
      %v2067 = vld [vmem:[%s3 + $0x30] sm:$0xff]
      %v2068 = vld [vmem:[%s3 + $0x38] sm:$0xff]
      %v2069 = vld [vmem:[%s3 + $0x40] sm:$0xff]
      %v2070 = vld [vmem:[%s3 + $0x48] sm:$0xff]
      %v2071 = vld [vmem:[%s3 + $0x50] sm:$0xff]
      %v2072 = vld [vmem:[%s3 + $0x58] sm:$0xff]
      %v2073 = vld [vmem:[%s3 + $0x60] sm:$0xff]
      %v2074 = vld [vmem:[%s3 + $0x68] sm:$0xff]
      %v2075 = vld [vmem:[%s3 + $0x70] sm:$0xff]
      %v2076 = vld [vmem:[%s3 + $0x78] sm:$0xff]
      %v2077 = vld [vmem:[%s3 + $0x80] sm:$0xff]
      %v2078 = vld [vmem:[%s3 + $0x88] sm:$0xff]
      %v2079 = vld [vmem:[%s3 + $0x90] sm:$0xff]
      %v2080 = vld [vmem:[%s3 + $0x98] sm:$0xff]
      %v2081 = vld [vmem:[%s3 + $0xa0] sm:$0xff]
      %v2082 = vld [vmem:[%s3 + $0xa8] sm:$0xff]
      %v2083 = vld [vmem:[%s3 + $0xb0] sm:$0xff]
      %v2084 = vld [vmem:[%s3 + $0xb8] sm:$0xff]
      %v2085 = vld [vmem:[%s3 + $0xc0] sm:$0xff]
      %v2086 = vld [vmem:[%s3 + $0xc8] sm:$0xff]
      %v2087 = vld [vmem:[%s3 + $0xd0] sm:$0xff]
      %v2088 = vld [vmem:[%s3 + $0xd8] sm:$0xff]
      %v2089 = vld [vmem:[%s3 + $0xe0] sm:$0xff]
      %v2090 = vld [vmem:[%s3 + $0xe8] sm:$0xff]
      %v2091 = vld [vmem:[%s3 + $0xf0] sm:$0xff]
      %v2092 = vld [vmem:[%s3 + $0xf8] sm:$0xff]
      %v2093 = vld [vmem:[%s3 + $0x100] sm:$0xff]
      %v2094 = vld [vmem:[%s3 + $0x108] sm:$0xff]
      %v2095 = vld [vmem:[%s3 + $0x110] sm:$0xff]
      %v2096 = vld [vmem:[%s3 + $0x118] sm:$0xff]
      %v2097 = vld [vmem:[%s3 + $0x120] sm:$0xff]
      %v2098 = vld [vmem:[%s3 + $0x128] sm:$0xff]
      %v2099 = vld [vmem:[%s3 + $0x130] sm:$0xff]
      %v2100 = vld [vmem:[%s3 + $0x138] sm:$0xff]
      %v2101 = vld [vmem:[%s3 + $0x140] sm:$0xff]
      %v2102 = vld [vmem:[%s3 + $0x148] sm:$0xff]
      %v2103 = vld [vmem:[%s3 + $0x150] sm:$0xff]
      %v2104 = vld [vmem:[%s3 + $0x158] sm:$0xff]
      %v2105 = vld [vmem:[%s3 + $0x160] sm:$0xff]
      %v2106 = vld [vmem:[%s3 + $0x168] sm:$0xff]
      %v2107 = vld [vmem:[%s3 + $0x170] sm:$0xff]
      %v2108 = vld [vmem:[%s3 + $0x178] sm:$0xff]
      %v2109 = vld [vmem:[%s3 + $0x180] sm:$0xff]
      %v2110 = vld [vmem:[%s3 + $0x188] sm:$0xff]
      %v2111 = vld [vmem:[%s3 + $0x190] sm:$0xff]
      %v2112 = vld [vmem:[%s3 + $0x198] sm:$0xff]
      %v2113 = vld [vmem:[%s3 + $0x1a0] sm:$0xff]
      %v2114 = vld [vmem:[%s3 + $0x1a8] sm:$0xff]
      %v2115 = vld [vmem:[%s3 + $0x1b0] sm:$0xff]
      %v2116 = vld [vmem:[%s3 + $0x1b8] sm:$0xff]
      %v2117 = vld [vmem:[%s3 + $0x1c0] sm:$0xff]
      %v2118 = vld [vmem:[%s3 + $0x1c8] sm:$0xff]
      %v2119 = vld [vmem:[%s3 + $0x1d0] sm:$0xff]
      %v2120 = vld [vmem:[%s3 + $0x1d8] sm:$0xff]
      %v2121 = vld [vmem:[%s3 + $0x1e0] sm:$0xff]
      %v2122 = vld [vmem:[%s3 + $0x1e8] sm:$0xff]
      %v2123 = vld [vmem:[%s3 + $0x1f0] sm:$0xff]
      %v2124 = vld [vmem:[%s3 + $0x1f8] sm:$0xff]
      %v2125 = vld [vmem:[%s4] sm:$0x3]
      %v2127 = vlaneseq
      %v2128 = vshrl.u32 %v2127, 7
      %v2129 = vsub.s32 0, %v2128
      %v2130 = vrot.slane %v2125, %v2129
      %v2131 = vlaneseq
      %v2132 = vshrl.u32 %v2131, 7
      %v2133 = vsub.s32 1, %v2132
      %v2134 = vrot.slane %v2125, %v2133
      %v2201 = vunpack.c.l.b16 %v2061
      %v2202 = vunpack.c.h.b16 %v2061
      %v2203 = vunpack.c.l.b16 %v2062
      %v2204 = vunpack.c.h.b16 %v2062
      %v2205 = vunpack.c.l.b16 %v2063
      %v2206 = vunpack.c.h.b16 %v2063
      %v2207 = vunpack.c.l.b16 %v2064
      %v2208 = vunpack.c.h.b16 %v2064
      %v2209 = vunpack.c.l.b16 %v2065
      %v2210 = vunpack.c.h.b16 %v2065
      %v2211 = vunpack.c.l.b16 %v2066
      %v2212 = vunpack.c.h.b16 %v2066
      %v2213 = vunpack.c.l.b16 %v2067
      %v2214 = vunpack.c.h.b16 %v2067
      %v2215 = vunpack.c.l.b16 %v2068
      %v2216 = vunpack.c.h.b16 %v2068
      %v2217 = vunpack.c.l.b16 %v2069
      %v2218 = vunpack.c.h.b16 %v2069
      %v2219 = vunpack.c.l.b16 %v2070
      %v2220 = vunpack.c.h.b16 %v2070
      %v2221 = vunpack.c.l.b16 %v2071
      %v2222 = vunpack.c.h.b16 %v2071
      %v2223 = vunpack.c.l.b16 %v2072
      %v2224 = vunpack.c.h.b16 %v2072
      %v2225 = vunpack.c.l.b16 %v2073
      %v2226 = vunpack.c.h.b16 %v2073
      %v2227 = vunpack.c.l.b16 %v2074
      %v2228 = vunpack.c.h.b16 %v2074
      %v2229 = vunpack.c.l.b16 %v2075
      %v2230 = vunpack.c.h.b16 %v2075
      %v2231 = vunpack.c.l.b16 %v2076
      %v2232 = vunpack.c.h.b16 %v2076
      %v2233 = vunpack.c.l.b16 %v2077
      %v2234 = vunpack.c.h.b16 %v2077
      %v2235 = vunpack.c.l.b16 %v2078
      %v2236 = vunpack.c.h.b16 %v2078
      %v2237 = vunpack.c.l.b16 %v2079
      %v2238 = vunpack.c.h.b16 %v2079
      %v2239 = vunpack.c.l.b16 %v2080
      %v2240 = vunpack.c.h.b16 %v2080
      %v2241 = vunpack.c.l.b16 %v2081
      %v2242 = vunpack.c.h.b16 %v2081
      %v2243 = vunpack.c.l.b16 %v2082
      %v2244 = vunpack.c.h.b16 %v2082
      %v2245 = vunpack.c.l.b16 %v2083
      %v2246 = vunpack.c.h.b16 %v2083
      %v2247 = vunpack.c.l.b16 %v2084
      %v2248 = vunpack.c.h.b16 %v2084
      %v2249 = vunpack.c.l.b16 %v2085
      %v2250 = vunpack.c.h.b16 %v2085
      %v2251 = vunpack.c.l.b16 %v2086
      %v2252 = vunpack.c.h.b16 %v2086
      %v2253 = vunpack.c.l.b16 %v2087
      %v2254 = vunpack.c.h.b16 %v2087
      %v2255 = vunpack.c.l.b16 %v2088
      %v2256 = vunpack.c.h.b16 %v2088
      %v2257 = vunpack.c.l.b16 %v2089
      %v2258 = vunpack.c.h.b16 %v2089
      %v2259 = vunpack.c.l.b16 %v2090
      %v2260 = vunpack.c.h.b16 %v2090
      %v2261 = vunpack.c.l.b16 %v2091
      %v2262 = vunpack.c.h.b16 %v2091
      %v2263 = vunpack.c.l.b16 %v2092
      %v2264 = vunpack.c.h.b16 %v2092
      %v2265 = vunpack.c.l.b16 %v2093
      %v2266 = vunpack.c.h.b16 %v2093
      %v2267 = vunpack.c.l.b16 %v2094
      %v2268 = vunpack.c.h.b16 %v2094
      %v2269 = vunpack.c.l.b16 %v2095
      %v2270 = vunpack.c.h.b16 %v2095
      %v2271 = vunpack.c.l.b16 %v2096
      %v2272 = vunpack.c.h.b16 %v2096
      %v2273 = vunpack.c.l.b16 %v2097
      %v2274 = vunpack.c.h.b16 %v2097
      %v2275 = vunpack.c.l.b16 %v2098
      %v2276 = vunpack.c.h.b16 %v2098
      %v2277 = vunpack.c.l.b16 %v2099
      %v2278 = vunpack.c.h.b16 %v2099
      %v2279 = vunpack.c.l.b16 %v2100
      %v2280 = vunpack.c.h.b16 %v2100
      %v2281 = vunpack.c.l.b16 %v2101
      %v2282 = vunpack.c.h.b16 %v2101
      %v2283 = vunpack.c.l.b16 %v2102
      %v2284 = vunpack.c.h.b16 %v2102
      %v2285 = vunpack.c.l.b16 %v2103
      %v2286 = vunpack.c.h.b16 %v2103
      %v2287 = vunpack.c.l.b16 %v2104
      %v2288 = vunpack.c.h.b16 %v2104
      %v2289 = vunpack.c.l.b16 %v2105
      %v2290 = vunpack.c.h.b16 %v2105
      %v2291 = vunpack.c.l.b16 %v2106
      %v2292 = vunpack.c.h.b16 %v2106
      %v2293 = vunpack.c.l.b16 %v2107
      %v2294 = vunpack.c.h.b16 %v2107
      %v2295 = vunpack.c.l.b16 %v2108
      %v2296 = vunpack.c.h.b16 %v2108
      %v2297 = vunpack.c.l.b16 %v2109
      %v2298 = vunpack.c.h.b16 %v2109
      %v2299 = vunpack.c.l.b16 %v2110
      %v2300 = vunpack.c.h.b16 %v2110
      %v2301 = vunpack.c.l.b16 %v2111
      %v2302 = vunpack.c.h.b16 %v2111
      %v2303 = vunpack.c.l.b16 %v2112
      %v2304 = vunpack.c.h.b16 %v2112
      %v2305 = vunpack.c.l.b16 %v2113
      %v2306 = vunpack.c.h.b16 %v2113
      %v2307 = vunpack.c.l.b16 %v2114
      %v2308 = vunpack.c.h.b16 %v2114
      %v2309 = vunpack.c.l.b16 %v2115
      %v2310 = vunpack.c.h.b16 %v2115
      %v2311 = vunpack.c.l.b16 %v2116
      %v2312 = vunpack.c.h.b16 %v2116
      %v2313 = vunpack.c.l.b16 %v2117
      %v2314 = vunpack.c.h.b16 %v2117
      %v2315 = vunpack.c.l.b16 %v2118
      %v2316 = vunpack.c.h.b16 %v2118
      %v2317 = vunpack.c.l.b16 %v2119
      %v2318 = vunpack.c.h.b16 %v2119
      %v2319 = vunpack.c.l.b16 %v2120
      %v2320 = vunpack.c.h.b16 %v2120
      %v2321 = vunpack.c.l.b16 %v2121
      %v2322 = vunpack.c.h.b16 %v2121
      %v2323 = vunpack.c.l.b16 %v2122
      %v2324 = vunpack.c.h.b16 %v2122
      %v2325 = vunpack.c.l.b16 %v2123
      %v2326 = vunpack.c.h.b16 %v2123
      %v2327 = vunpack.c.l.b16 %v2124
      %v2328 = vunpack.c.h.b16 %v2124
      %v2329 = vpack.c.b16 %v2203, %v2201
      %v2330 = vpack.c.b16 %v2204, %v2202
      %v2331 = vpack.c.b16 %v2207, %v2205
      %v2332 = vpack.c.b16 %v2208, %v2206
      %v2333 = vpack.c.b16 %v2211, %v2209
      %v2334 = vpack.c.b16 %v2212, %v2210
      %v2335 = vpack.c.b16 %v2215, %v2213
      %v2336 = vpack.c.b16 %v2216, %v2214
      %v2337 = vpack.c.b16 %v2219, %v2217
      %v2338 = vpack.c.b16 %v2220, %v2218
      %v2339 = vpack.c.b16 %v2223, %v2221
      %v2340 = vpack.c.b16 %v2224, %v2222
      %v2341 = vpack.c.b16 %v2227, %v2225
      %v2342 = vpack.c.b16 %v2228, %v2226
      %v2343 = vpack.c.b16 %v2231, %v2229
      %v2344 = vpack.c.b16 %v2232, %v2230
      %v2345 = vpack.c.b16 %v2235, %v2233
      %v2346 = vpack.c.b16 %v2236, %v2234
      %v2347 = vpack.c.b16 %v2239, %v2237
      %v2348 = vpack.c.b16 %v2240, %v2238
      %v2349 = vpack.c.b16 %v2243, %v2241
      %v2350 = vpack.c.b16 %v2244, %v2242
      %v2351 = vpack.c.b16 %v2247, %v2245
      %v2352 = vpack.c.b16 %v2248, %v2246
      %v2353 = vpack.c.b16 %v2251, %v2249
      %v2354 = vpack.c.b16 %v2252, %v2250
      %v2355 = vpack.c.b16 %v2255, %v2253
      %v2356 = vpack.c.b16 %v2256, %v2254
      %v2357 = vpack.c.b16 %v2259, %v2257
      %v2358 = vpack.c.b16 %v2260, %v2258
      %v2359 = vpack.c.b16 %v2263, %v2261
      %v2360 = vpack.c.b16 %v2264, %v2262
      %v2361 = vpack.c.b16 %v2267, %v2265
      %v2362 = vpack.c.b16 %v2268, %v2266
      %v2363 = vpack.c.b16 %v2271, %v2269
      %v2364 = vpack.c.b16 %v2272, %v2270
      %v2365 = vpack.c.b16 %v2275, %v2273
      %v2366 = vpack.c.b16 %v2276, %v2274
      %v2367 = vpack.c.b16 %v2279, %v2277
      %v2368 = vpack.c.b16 %v2280, %v2278
      %v2369 = vpack.c.b16 %v2283, %v2281
      %v2370 = vpack.c.b16 %v2284, %v2282
      %v2371 = vpack.c.b16 %v2287, %v2285
      %v2372 = vpack.c.b16 %v2288, %v2286
      %v2373 = vpack.c.b16 %v2291, %v2289
      %v2374 = vpack.c.b16 %v2292, %v2290
      %v2375 = vpack.c.b16 %v2295, %v2293
      %v2376 = vpack.c.b16 %v2296, %v2294
      %v2377 = vpack.c.b16 %v2299, %v2297
      %v2378 = vpack.c.b16 %v2300, %v2298
      %v2379 = vpack.c.b16 %v2303, %v2301
      %v2380 = vpack.c.b16 %v2304, %v2302
      %v2381 = vpack.c.b16 %v2307, %v2305
      %v2382 = vpack.c.b16 %v2308, %v2306
      %v2383 = vpack.c.b16 %v2311, %v2309
      %v2384 = vpack.c.b16 %v2312, %v2310
      %v2385 = vpack.c.b16 %v2315, %v2313
      %v2386 = vpack.c.b16 %v2316, %v2314
      %v2387 = vpack.c.b16 %v2319, %v2317
      %v2388 = vpack.c.b16 %v2320, %v2318
      %v2389 = vpack.c.b16 %v2323, %v2321
      %v2390 = vpack.c.b16 %v2324, %v2322
      %v2391 = vpack.c.b16 %v2327, %v2325
      %v2392 = vpack.c.b16 %v2328, %v2326
      %2457 = vmatprep.subr.bf16.mxu0 %v2330
      %2458 = vmatpush1.bf16.msra.mxu0 %v2329
      %2459 = vmatprep.subr.bf16.mxu0 %v2332
      %2460 = vmatpush1.bf16.msra.mxu0 %v2331
      %2461 = vmatprep.subr.bf16.mxu0 %v2334
      %2462 = vmatpush1.bf16.msra.mxu0 %v2333
      %2463 = vmatprep.subr.bf16.mxu0 %v2336
      %2464 = vmatpush1.bf16.msra.mxu0 %v2335
      %2465 = vmatprep.subr.bf16.mxu0 %v2338
      %2466 = vmatpush1.bf16.msra.mxu0 %v2337
      %2467 = vmatprep.subr.bf16.mxu0 %v2340
      %2468 = vmatpush1.bf16.msra.mxu0 %v2339
      %2469 = vmatprep.subr.bf16.mxu0 %v2342
      %2470 = vmatpush1.bf16.msra.mxu0 %v2341
      %2471 = vmatprep.subr.bf16.mxu0 %v2344
      %2472 = vmatpush1.bf16.msra.mxu0 %v2343
      %2473 = vmatprep.subr.bf16.mxu0 %v2346
      %2474 = vmatpush1.bf16.msra.mxu0 %v2345
      %2475 = vmatprep.subr.bf16.mxu0 %v2348
      %2476 = vmatpush1.bf16.msra.mxu0 %v2347
      %2477 = vmatprep.subr.bf16.mxu0 %v2350
      %2478 = vmatpush1.bf16.msra.mxu0 %v2349
      %2479 = vmatprep.subr.bf16.mxu0 %v2352
      %2480 = vmatpush1.bf16.msra.mxu0 %v2351
      %2481 = vmatprep.subr.bf16.mxu0 %v2354
      %2482 = vmatpush1.bf16.msra.mxu0 %v2353
      %2483 = vmatprep.subr.bf16.mxu0 %v2356
      %2484 = vmatpush1.bf16.msra.mxu0 %v2355
      %2485 = vmatprep.subr.bf16.mxu0 %v2358
      %2486 = vmatpush1.bf16.msra.mxu0 %v2357
      %2487 = vmatprep.subr.bf16.mxu0 %v2360
      %2488 = vmatpush1.bf16.msra.mxu0 %v2359
      %2489 = vmatprep.mubr.bf16.mxu0 %v2058
      %2490 = vmatmul.mubr.bf16.gmra.mrb[0].mxu0 %v2057
      %v2491 = vpop.f32.mrb[0].mxu0
      %v2492 = vadd.f32 %v2130, %v2491
      %v2493 = vpop.f32.mrb[0].mxu0
      %v2494 = vadd.f32 %v2134, %v2493
      %v2495 = vpop.f32.mrb[0].mxu0
      %v2496 = vpop.f32.mrb[0].mxu0
      %2497 = vdwg.mxu0
      %2498 = vmatprep.subr.bf16.mxu0 %v2362
      %2499 = vmatpush1.bf16.msra.mxu0 %v2361
      %2500 = vmatprep.subr.bf16.mxu0 %v2364
      %2501 = vmatpush1.bf16.msra.mxu0 %v2363
      %2502 = vmatprep.subr.bf16.mxu0 %v2366
      %2503 = vmatpush1.bf16.msra.mxu0 %v2365
      %2504 = vmatprep.subr.bf16.mxu0 %v2368
      %2505 = vmatpush1.bf16.msra.mxu0 %v2367
      %2506 = vmatprep.subr.bf16.mxu0 %v2370
      %2507 = vmatpush1.bf16.msra.mxu0 %v2369
      %2508 = vmatprep.subr.bf16.mxu0 %v2372
      %2509 = vmatpush1.bf16.msra.mxu0 %v2371
      %2510 = vmatprep.subr.bf16.mxu0 %v2374
      %2511 = vmatpush1.bf16.msra.mxu0 %v2373
      %2512 = vmatprep.subr.bf16.mxu0 %v2376
      %2513 = vmatpush1.bf16.msra.mxu0 %v2375
      %2514 = vmatprep.subr.bf16.mxu0 %v2378
      %2515 = vmatpush1.bf16.msra.mxu0 %v2377
      %2516 = vmatprep.subr.bf16.mxu0 %v2380
      %2517 = vmatpush1.bf16.msra.mxu0 %v2379
      %2518 = vmatprep.subr.bf16.mxu0 %v2382
      %2519 = vmatpush1.bf16.msra.mxu0 %v2381
      %2520 = vmatprep.subr.bf16.mxu0 %v2384
      %2521 = vmatpush1.bf16.msra.mxu0 %v2383
      %2522 = vmatprep.subr.bf16.mxu0 %v2386
      %2523 = vmatpush1.bf16.msra.mxu0 %v2385
      %2524 = vmatprep.subr.bf16.mxu0 %v2388
      %2525 = vmatpush1.bf16.msra.mxu0 %v2387
      %2526 = vmatprep.subr.bf16.mxu0 %v2390
      %2527 = vmatpush1.bf16.msra.mxu0 %v2389
      %2528 = vmatprep.subr.bf16.mxu0 %v2392
      %2529 = vmatpush1.bf16.msra.mxu0 %v2391
      %2530 = vmatprep.mubr.bf16.mxu0 %v2060
      %2531 = vmatmul.mubr.bf16.gmra.mrb[0].mxu0 %v2059
      %v2532 = vpop.f32.mrb[0].mxu0
      %v2533 = vadd.f32 %v2492, %v2532
      %v2534 = vpop.f32.mrb[0].mxu0
      %v2535 = vadd.f32 %v2494, %v2534
      %v2536 = vpop.f32.mrb[0].mxu0
      %v2537 = vpop.f32.mrb[0].mxu0
      %2538 = vdwg.mxu0
      %v2539 = vmul.f32 %v2533, 0.2
      %v2540 = vmul.f32 %v2535, 0.2
      %v2541 = vmax.f32 %v2533, %v2539
      %v2542 = vmax.f32 %v2535, %v2540
      %v2543 = vld [vmem:[%s5] sm:$0x3]
      %v2545 = vlaneseq
      %v2546 = vshrl.u32 %v2545, 7
      %v2547 = vsub.s32 0, %v2546
      %v2548 = vrot.slane %v2543, %v2547
      %v2549 = vlaneseq
      %v2550 = vshrl.u32 %v2549, 7
      %v2551 = vsub.s32 1, %v2550
      %v2552 = vrot.slane %v2543, %v2551
      %v2555 = vmul.f32 %v2541, %v2548
      %v2556 = vmul.f32 %v2542, %v2552
      %v2557 = vadd.f32 %v2555, %v2556
      %2558 = vadd.xlane.f32.xlu0 %v2557
      %v2559 = vpop.xlane.xlu0 %2558
      %v2560 = vld [vmem:[#allocation3] sm:$0x1]
      %v2562 = vlaneseq
      %v2563 = vshrl.u32 %v2562, 7
      %v2564 = vsub.s32 0, %v2563
      %v2565 = vrot.slane %v2560, %v2564
      %v2567 = vadd.f32 %v2559, %v2565
      %vm2568 = vcmask 7168
      %2569 = vst.msk [vmem:[#allocation4] sm:$0xff] %vm2568, %v2567
    $region37: #{discriminator_forward.1} parent=1 // pred_fallthru
      _
    // Predicated region
    $region38: #{discriminator_forward.1} parent=1 // pred_check
      _
    $region39: #{discriminator_forward.1} parent=1 // pred_check_branch
      %2571 = sbr.rel (0) target = $region41
    $region40: #{discriminator_forward.1} parent=1 // pred_region
      // Predicated region
      $region42: #{discriminator_forward.1} parent=40 // pred_check
        _
      $region43: #{discriminator_forward.1} parent=40 // pred_check_branch
        %2573 = sbr.rel (0) target = $region45
      $region44: #{discriminator_forward.1} parent=40 // pred_region
        // Predicated region
        $region46: #{discriminator_forward.1} parent=44 // pred_check
          _
        $region47: #{discriminator_forward.1} parent=44 // pred_check_branch
          %2575 = sbr.rel target = $region49
        $region48: #{discriminator_forward.1} parent=44 // pred_region
          // Predicated region
          $region61: #{discriminator_forward.1} parent=48 // pred_check
            _
          $region62: #{discriminator_forward.1} parent=48 // pred_check_branch
            %2590 = sbr.rel (0) target = $region64
          $region63: #{discriminator_forward.1} parent=48 // pred_region
            loop: start=0, step=1, limit=1
            $region65: #{discriminator_forward.1} parent=63 // loop_pre_header
              _
            $region66: #{discriminator_forward.1} parent=63 // loop_header
              %s2593 = sphi 0, %s2597
              %p2594 = scmp.ge.s32.totalorder %s2593, 1
              %s2598 = sphi [#allocation4], [#allocation4]
              %s2599 = sphi %s7, %s7
            $region67: #{discriminator_forward.1} parent=63 // loop_header_branch
              %2596 = sbr.rel (%p2594) target = $region71
            $region68: #{discriminator_forward.1} parent=63 // loop_body
              %v2600 = vld [vmem:[%s2598] sm:$0x3]
              %2601 = vst [vmem:[%s2599] sm:$0x3] %v2600
            $region69: #{discriminator_forward.1} parent=63 // loop_footer
              %s2597 = sadd.s32 1, %s2593
            $region70: #{discriminator_forward.1} parent=63 // loop_footer_branch
              %2592 = sbr.rel target = $region66
            $region71: #{discriminator_forward.1} parent=63 // loop_exit
              _
          $region64: #{discriminator_forward.1} parent=48 // pred_fallthru
            _
        $region49: #{discriminator_forward.1} parent=44 // pred_fallthru
          _
        // Predicated region
        $region50: #{discriminator_forward.1} parent=44 // pred_check
          _
        $region51: #{discriminator_forward.1} parent=44 // pred_check_branch
          %2577 = sbr.rel (0) target = $region53
        $region52: #{discriminator_forward.1} parent=44 // pred_region
          loop: start=0, step=1, limit=1
          $region54: #{discriminator_forward.1} parent=52 // loop_pre_header
            _
          $region55: #{discriminator_forward.1} parent=52 // loop_header
            %s2580 = sphi 0, %s2584
            %p2581 = scmp.ge.s32.totalorder %s2580, 1
            %s2585 = sphi [#allocation4], [#allocation4]
            %s2586 = sphi %s7, %s7
          $region56: #{discriminator_forward.1} parent=52 // loop_header_branch
            %2583 = sbr.rel (%p2581) target = $region60
          $region57: #{discriminator_forward.1} parent=52 // loop_body
            %v2587 = vld [vmem:[%s2585] sm:$0x3]
            %2588 = vst [vmem:[%s2586] sm:$0x3] %v2587
          $region58: #{discriminator_forward.1} parent=52 // loop_footer
            %s2584 = sadd.s32 1, %s2580
          $region59: #{discriminator_forward.1} parent=52 // loop_footer_branch
            %2579 = sbr.rel target = $region55
          $region60: #{discriminator_forward.1} parent=52 // loop_exit
            _
        $region53: #{discriminator_forward.1} parent=44 // pred_fallthru
          _
      $region45: #{discriminator_forward.1} parent=40 // pred_fallthru
        _
      %2602 = vnop
    $region41: #{discriminator_forward.1} parent=1 // pred_fallthru
      _
    // Predicated region
    $region72: #{discriminator_forward.1} parent=1 // pred_check
      _
    $region73: #{discriminator_forward.1} parent=1 // pred_check_branch
      %2604 = sbr.rel (0) target = $region75
    $region74: #{discriminator_forward.1} parent=1 // pred_region
      _
    $region75: #{discriminator_forward.1} parent=1 // pred_fallthru
      _

</llo_original>
